<compile_context>
chip_gen: v5e
topology: v5e:2x2
jax: 0.10.0
libtpu: 0.0.40
codegen_flags: <defaults>
</compile_context>

<pallas_src>
import functools
import math

import numpy as np
import jax
import jax.numpy as jnp
from jax.experimental import pallas as pl
from jax.experimental.pallas import tpu as pltpu

LN_EPS = 1e-5
MASK_VALUE = -1e30

# Row layout of the packed (14, F) bias / LayerNorm slab.
_R_BT, _R_BI = 0, 1
_R_BQ_T, _R_BK_I, _R_BV_I = 2, 3, 4      # biases for the text-stream QKV chunks
_R_BK_T, _R_BV_T, _R_BQ_I = 5, 6, 7      # biases for the image-stream QKV chunks
_R_BO_T, _R_BO_I = 8, 9
_R_G_T, _R_BE_T, _R_G_I, _R_BE_I = 10, 11, 12, 13


def _layer_norm(x, gamma, beta):
    mean = jnp.mean(x, axis=-1, keepdims=True)
    var = jnp.mean((x - mean) ** 2, axis=-1, keepdims=True)
    return (x - mean) * jax.lax.rsqrt(var + LN_EPS) * gamma + beta


# ---------------------------------------------------------------------------
# Pallas kernel: one grid step covers a block of `bb` batch elements
# (default bb == B, i.e. the whole batch in a single step).
# ---------------------------------------------------------------------------
def _fusion_kernel(num_heads, bb, Tt, Ti, use_bf16,
                   text_ref, img_ref,
                   wt_ref, wi_ref, wqkv_ref, wout_ref,
                   rows_ref, cst_t_ref, cst_i_ref,
                   out_ref):
    F = wt_ref.shape[1]
    H = num_heads
    hd = F // H
    Dt = text_ref.shape[-1]
    Di = img_ref.shape[-1]
    Nt = bb * Tt
    Ni = bb * Ti

    mm_dtype = jnp.bfloat16 if use_bf16 else jnp.float32

    def mm(a, b):
        return jnp.dot(a.astype(mm_dtype), b.astype(mm_dtype),
                       preferred_element_type=jnp.float32)

    def mm_nt(a, b):
        # a @ b.T without materializing a transposed copy of b.
        return jax.lax.dot_general(
            a.astype(mm_dtype), b.astype(mm_dtype),
            dimension_numbers=(((1,), (1,)), ((), ())),
            preferred_element_type=jnp.float32)

    def row(i):
        return rows_ref[i:i + 1, :]          # (1, F) row, broadcast onto (N, F)

    # Flatten batch into rows (copy-free because Tt, Ti are multiples of 8).
    text = text_ref[...].reshape(Nt, Dt)
    img = img_ref[...].reshape(Ni, Di)

    # Input projections (2 matmuls).
    text_proj = mm(text, wt_ref[...]) + row(_R_BT)
    image_proj = mm(img, wi_ref[...]) + row(_R_BI)

    # Fused wide QKV projections (2 matmuls instead of 6); the 1/sqrt(hd)
    # softmax scale is folded into the q columns / q bias rows by the wrapper.
    t_qkv = mm(text_proj, wqkv_ref[0])   # [ q_text_attn | k_img_attn | v_img_attn ]
    i_qkv = mm(image_proj, wqkv_ref[1])  # [ k_text_attn | v_text_attn | q_img_attn ]

    q_text_attn = t_qkv[:, 0 * F:1 * F] + row(_R_BQ_T)
    k_img_attn = t_qkv[:, 1 * F:2 * F] + row(_R_BK_I)
    v_img_attn = t_qkv[:, 2 * F:3 * F] + row(_R_BV_I)
    k_text_attn = i_qkv[:, 0 * F:1 * F] + row(_R_BK_T)
    v_text_attn = i_qkv[:, 1 * F:2 * F] + row(_R_BV_T)
    q_img_attn = i_qkv[:, 2 * F:3 * F] + row(_R_BQ_I)

    # Host-precomputed constants: [mask bias ; pooling matrix] per direction.
    mask_text = cst_t_ref[0:Nt, :]           # (Nt, Ni) additive 0 / -1e30
    pool_image = cst_t_ref[Nt:Nt + bb, :]    # (bb, Ni), 0.5/Ti folded in
    mask_image = cst_i_ref[0:Ni, :]          # (Ni, Nt)
    pool_text = cst_i_ref[Ni:Ni + bb, :]     # (bb, Nt), 0.5/Tt folded in

    def attention(q, k, v, mask_bias, wo, bo):
        # Static unroll over the small head count (review option (b)).
        head_outs = []
        for h in range(H):
            qh = q[:, h * hd:(h + 1) * hd]
            kh = k[:, h * hd:(h + 1) * hd]
            vh = v[:, h * hd:(h + 1) * hd]
            s = mm_nt(qh, kh)                       # (Nq, Nk), no K transpose
            if bb > 1:
                s = s + mask_bias                   # block-diagonal batch bias
            s = s - jnp.max(s, axis=-1, keepdims=True)
            p = jnp.exp(s)
            p = p * pl.reciprocal(jnp.sum(p, axis=-1, keepdims=True),
                                  approx=use_bf16)
            head_outs.append(mm(p, vh))
        o = jnp.concatenate(head_outs, axis=-1)     # (Nq, F)
        return mm(o, wo) + bo

    # Cross attention: text queries attend to image keys/values.
    attn_text = attention(q_text_attn, k_text_attn, v_text_attn,
                          mask_text, wout_ref[0], row(_R_BO_T))
    text_fused = _layer_norm(text_proj + attn_text, row(_R_G_T), row(_R_BE_T))

    # Cross attention: image queries attend to text keys/values.
    attn_image = attention(q_img_attn, k_img_attn, v_img_attn,
                           mask_image, wout_ref[1], row(_R_BO_I))
    image_fused = _layer_norm(image_proj + attn_image, row(_R_G_I), row(_R_BE_I))

    # Mean pooling over sequence + final 0.5 average, via precomputed pooling
    # matrices (kept in f32; output is a single (bb, F) slab).
    out_ref[...] = (
        jnp.dot(pool_text, text_fused, preferred_element_type=jnp.float32)
        + jnp.dot(pool_image, image_fused, preferred_element_type=jnp.float32))


# ---------------------------------------------------------------------------
# Wrapper: packs/folds parameters, builds constants, launches the kernel.
# ---------------------------------------------------------------------------
def cross_modal_fusion(text_tokens, image_tokens, params, num_heads,
                       *, batch_block=None, use_bf16_matmul=False):
    (wt, bt, wi, bi,
     wq_t, wk_t, wv_t, bq_t, bk_t, bv_t, wo_t, bo_t, g_t, be_t,
     wq_i, wk_i, wv_i, bq_i, bk_i, bv_i, wo_i, bo_i, g_i, be_i) = params

    B, Tt, Dt = text_tokens.shape
    _, Ti, Di = image_tokens.shape
    F = wt.shape[1]
    assert F % num_heads == 0
    # The copy-free (bb*T, D) flatten inside the kernel requires each batch
    # element's rows to tile the sublane dimension exactly.
    assert Tt % 8 == 0 and Ti % 8 == 0, "sequence lengths must be multiples of 8"
    hd = F // num_heads
    scale = 1.0 / math.sqrt(hd)

    # Default: whole batch in one grid step (single-TC v5e/v6e), capped so the
    # batch-folded attention rows stay within one MXU tile (bb*T <= 128);
    # beyond that the block-diagonal fold is quadratic wasted score work.
    # On v7x pass batch_block=B//2 (ideally a multiple of 8) to use both TCs.
    if batch_block is None:
        batch_block = B
        while batch_block > 1 and (B % batch_block != 0
                                   or batch_block * max(Tt, Ti) > 128):
            batch_block -= 1
    bb = batch_block
    assert B % bb == 0
    assert bb * max(Tt, Ti) <= 256, \
        "batch_block too large: folded attention exceeds two MXU tiles"
    nb = B // bb
    Nt, Ni = bb * Tt, bb * Ti

    # --- packed weights -----------------------------------------------------
    w_dtype = jnp.bfloat16 if use_bf16_matmul else jnp.float32
    w_text = wt.astype(w_dtype)
    w_image = wi.astype(w_dtype)
    # Six Q/K/V projections fused into two wide (F, 3F) matmuls, stacked into
    # one operand; 1/sqrt(hd) folded into the query columns.
    w_qkv = jnp.stack([
        jnp.concatenate([wq_t * scale, wk_i, wv_i], axis=1),
        jnp.concatenate([wk_t, wv_t, wq_i * scale], axis=1)],
        axis=0).astype(w_dtype)                                  # (2, F, 3F)
    w_out = jnp.stack([wo_t, wo_i], axis=0).astype(w_dtype)      # (2, F, F)

    # All (1, F) bias / LayerNorm rows packed into a single (14, F) slab
    # (one DMA / one VMEM tile instead of 14).
    rows = jnp.concatenate([
        bt, bi,
        bq_t * scale, bk_i, bv_i,
        bk_t, bv_t, bq_i * scale,
        bo_t, bo_i, g_t, be_t, g_i, be_i], axis=0).astype(jnp.float32)

    # --- host-built constants: [mask bias ; pooling matrix] per direction ---
    def _mask(tq, tk):
        m = np.full((bb * tq, bb * tk), MASK_VALUE, np.float32)
        for r in range(bb):
            m[r * tq:(r + 1) * tq, r * tk:(r + 1) * tk] = 0.0
        return m

    def _pool(t):
        m = np.zeros((bb, bb * t), np.float32)
        for r in range(bb):
            m[r, r * t:(r + 1) * t] = 0.5 / t
        return m

    cst_t = jnp.asarray(np.concatenate([_mask(Tt, Ti), _pool(Ti)], axis=0))
    cst_i = jnp.asarray(np.concatenate([_mask(Ti, Tt), _pool(Tt)], axis=0))

    weights = (w_text, w_image, w_qkv, w_out, rows, cst_t, cst_i)

    def _const_spec(arr):
        nd = arr.ndim
        return pl.BlockSpec(arr.shape, lambda b, _nd=nd: (0,) * _nd)

    in_specs = [
        pl.BlockSpec((bb, Tt, Dt), lambda b: (b, 0, 0)),
        pl.BlockSpec((bb, Ti, Di), lambda b: (b, 0, 0)),
    ] + [_const_spec(w) for w in weights]

    # Advisory cost estimate so XLA can overlap this small latency-bound call.
    flops = int(
        2 * B * Tt * Dt * F + 2 * B * Ti * Di * F           # input projections
        + 2 * B * (Tt + Ti) * F * 3 * F                     # fused QKV matmuls
        + 8 * B * bb * Tt * Ti * F                          # scores + p@v, both dirs
        + 2 * B * (Tt + Ti) * F * F                         # output projections
        + 2 * B * (Tt + Ti) * F)                            # pooling
    transcendentals = int(2 * B * num_heads * bb * Tt * Ti + B * (Tt + Ti))
    bytes_accessed = int(
        4 * (text_tokens.size + image_tokens.size + B * F)
        + sum(int(w.size) * w.dtype.itemsize for w in weights))

    kernel = functools.partial(_fusion_kernel, num_heads, bb, Tt, Ti,
                               use_bf16_matmul)

    return pl.pallas_call(
        kernel,
        out_shape=jax.ShapeDtypeStruct((B, F), jnp.float32),
        grid=(nb,),
        in_specs=in_specs,
        out_specs=pl.BlockSpec((bb, F), lambda b: (b, 0)),
        compiler_params=pltpu.CompilerParams(
            dimension_semantics=("parallel",),
            vmem_limit_bytes=32 * 1024 * 1024),
        cost_estimate=pl.CostEstimate(flops=flops,
                                      transcendentals=transcendentals,
                                      bytes_accessed=bytes_accessed),
    )(text_tokens, image_tokens, *weights)


# ---------------------------------------------------------------------------
# Pure-JAX reference (independent path: unfused weights, per-head loop,
# explicit 1/sqrt(hd) scale, softmax via division) for correctness check.
# ---------------------------------------------------------------------------
def _reference(text_tokens, image_tokens, params, num_heads):
    (wt, bt, wi, bi,
     wq_t, wk_t, wv_t, bq_t, bk_t, bv_t, wo_t, bo_t, g_t, be_t,
     wq_i, wk_i, wv_i, bq_i, bk_i, bv_i, wo_i, bo_i, g_i, be_i) = params

    def layer_norm(x, g, b):
        m = jnp.mean(x, axis=-1, keepdims=True)
        v = jnp.mean((x - m) ** 2, axis=-1, keepdims=True)
        return (x - m) / jnp.sqrt(v + LN_EPS) * g + b

    def mha(q_in, kv_in, wq, wk, wv, bq, bk, bv, wo, bo):
        q = q_in @ wq + bq
        k = kv_in @ wk + bk
        v = kv_in @ wv + bv
        F = q.shape[-1]
        hd = F // num_heads
        outs = []
        for h in range(num_heads):
            qh = q[:, h * hd:(h + 1) * hd]
            kh = k[:, h * hd:(h + 1) * hd]
            vh = v[:, h * hd:(h + 1) * hd]
            s = (qh @ kh.T) / math.sqrt(hd)
            p = jax.nn.softmax(s, axis=-1)
            outs.append(p @ vh)
        return jnp.concatenate(outs, axis=-1) @ wo + bo

    def one(text, img):
        tp = text @ wt + bt
        ip = img @ wi + bi
        at = mha(tp, ip, wq_t, wk_t, wv_t, bq_t, bk_t, bv_t, wo_t, bo_t)
        tf = layer_norm(tp + at, g_t, be_t)
        ai = mha(ip, tp, wq_i, wk_i, wv_i, bq_i, bk_i, bv_i, wo_i, bo_i)
        imf = layer_norm(ip + ai, g_i, be_i)
        return (jnp.mean(tf, axis=0) + jnp.mean(imf, axis=0)) * 0.5

    return jax.vmap(one)(text_tokens, image_tokens)


# ---------------------------------------------------------------------------
# Deterministic parameter construction (synthetic init, PyTorch-like scales).
# Weights are (in_dim, out_dim); mapping torch's packed in_proj_weight layout
# would be a simple transpose + row-split.
# ---------------------------------------------------------------------------
def make_params(key, text_hidden_dim, image_hidden_dim, fusion_dim):
    ks = iter(jax.random.split(key, 32))

    def lin(in_dim, out_dim):
        bound = 1.0 / math.sqrt(in_dim)
        w = jax.random.uniform(next(ks), (in_dim, out_dim), jnp.float32, -bound, bound)
        b = jax.random.uniform(next(ks), (1, out_dim), jnp.float32, -bound, bound)
        return w, b

    wt, bt = lin(text_hidden_dim, fusion_dim)
    wi, bi = lin(image_hidden_dim, fusion_dim)

    def mha_params():
        wq, bq = lin(fusion_dim, fusion_dim)
        wk, bk = lin(fusion_dim, fusion_dim)
        wv, bv = lin(fusion_dim, fusion_dim)
        wo, bo = lin(fusion_dim, fusion_dim)
        return wq, wk, wv, bq, bk, bv, wo, bo

    attn_t = mha_params()
    g_t = jnp.ones((1, fusion_dim), jnp.float32)
    be_t = jnp.zeros((1, fusion_dim), jnp.float32)
    attn_i = mha_params()
    g_i = jnp.ones((1, fusion_dim), jnp.float32)
    be_i = jnp.zeros((1, fusion_dim), jnp.float32)

    return (wt, bt, wi, bi,
            *attn_t, g_t, be_t,
            *attn_i, g_i, be_i)


if __name__ == "__main__":
    B = 2
    TEXT_SEQ, IMAGE_SEQ = 8, 16
    TEXT_HIDDEN, IMAGE_HIDDEN = 48, 40
    FUSION_DIM, NUM_HEADS = 32, 4

    root = jax.random.PRNGKey(0)
    k_text, k_img, k_params = jax.random.split(root, 3)
    text_tokens = jax.random.normal(k_text, (B, TEXT_SEQ, TEXT_HIDDEN), jnp.float32)
    image_tokens = jax.random.normal(k_img, (B, IMAGE_SEQ, IMAGE_HIDDEN), jnp.float32)
    params = make_params(k_params, TEXT_HIDDEN, IMAGE_HIDDEN, FUSION_DIM)

    ref = _reference(text_tokens, image_tokens, params, NUM_HEADS)

    # Exact (f32 matmul) path.
    fused = cross_modal_fusion(text_tokens, image_tokens, params, NUM_HEADS)
    fused = jax.block_until_ready(fused)
    assert fused.shape == (B, FUSION_DIM)
    assert jnp.allclose(fused, ref, atol=1e-4, rtol=1e-4), (
        f"f32 mismatch: max abs err {jnp.max(jnp.abs(fused - ref))}")

    # Relaxed-precision path: bf16 matmul operands (MXU-native on v5e/v6e/v7x),
    # f32 LayerNorm/softmax, approx reciprocal.  Loose sanity tolerance.
    fused_bf16 = cross_modal_fusion(text_tokens, image_tokens, params,
                                    NUM_HEADS, use_bf16_matmul=True)
    fused_bf16 = jax.block_until_ready(fused_bf16)
    bf16_err = float(jnp.max(jnp.abs(fused_bf16 - ref)))
    assert bf16_err < 5e-2, f"bf16 path mismatch: max abs err {bf16_err}"

    print("KERNEL_OK")
</pallas_src>

<mosaic_0001>
module attributes {stable_mosaic.version = 11 : i64} {
  func.func @_fusion_kernel(%arg0: i32, %arg1: memref<2x8x48xf32, #tpu.memory_space<vmem>>, %arg2: memref<2x16x40xf32, #tpu.memory_space<vmem>>, %arg3: memref<48x32xf32, #tpu.memory_space<vmem>>, %arg4: memref<40x32xf32, #tpu.memory_space<vmem>>, %arg5: memref<2x32x96xf32, #tpu.memory_space<vmem>>, %arg6: memref<2x32x32xf32, #tpu.memory_space<vmem>>, %arg7: memref<14x32xf32, #tpu.memory_space<vmem>>, %arg8: memref<18x32xf32, #tpu.memory_space<vmem>>, %arg9: memref<34x16xf32, #tpu.memory_space<vmem>>, %arg10: memref<2x32xf32, #tpu.memory_space<vmem>>) attributes {dimension_semantics = [#tpu.dimension_semantics<parallel>], iteration_bounds = array<i64: 1>, scalar_prefetch = 0 : i64, scratch_operands = 0 : i64, tpu.core_type = #tpu.core_type<tc>, window_params = [{transform_indices = @transform_0, window_bounds = array<i64: 2, 8, 48>}, {transform_indices = @transform_1, window_bounds = array<i64: 2, 16, 40>}, {pipeline_mode = #tpu.pipeline_mode<synchronous>, transform_indices = @transform_2, window_bounds = array<i64: 48, 32>}, {pipeline_mode = #tpu.pipeline_mode<synchronous>, transform_indices = @transform_3, window_bounds = array<i64: 40, 32>}, {pipeline_mode = #tpu.pipeline_mode<synchronous>, transform_indices = @transform_4, window_bounds = array<i64: 2, 32, 96>}, {pipeline_mode = #tpu.pipeline_mode<synchronous>, transform_indices = @transform_5, window_bounds = array<i64: 2, 32, 32>}, {pipeline_mode = #tpu.pipeline_mode<synchronous>, transform_indices = @transform_6, window_bounds = array<i64: 14, 32>}, {pipeline_mode = #tpu.pipeline_mode<synchronous>, transform_indices = @transform_7, window_bounds = array<i64: 18, 32>}, {pipeline_mode = #tpu.pipeline_mode<synchronous>, transform_indices = @transform_8, window_bounds = array<i64: 34, 16>}, {transform_indices = @transform_9, window_bounds = array<i64: 2, 32>}]} {
    %c0 = arith.constant 0 : index
    %c0_0 = arith.constant 0 : index
    %c0_1 = arith.constant 0 : index
    %0 = vector.load %arg1[%c0, %c0_0, %c0_1] : memref<2x8x48xf32, #tpu.memory_space<vmem>>, vector<2x8x48xf32>
    %1 = vector.shape_cast %0 : vector<2x8x48xf32> to vector<16x48xf32>
    %c0_2 = arith.constant 0 : index
    %c0_3 = arith.constant 0 : index
    %c0_4 = arith.constant 0 : index
    %2 = vector.load %arg2[%c0_2, %c0_3, %c0_4] : memref<2x16x40xf32, #tpu.memory_space<vmem>>, vector<2x16x40xf32>
    %3 = vector.shape_cast %2 : vector<2x16x40xf32> to vector<32x40xf32>
    %c0_5 = arith.constant 0 : index
    %c0_6 = arith.constant 0 : index
    %4 = vector.load %arg3[%c0_5, %c0_6] : memref<48x32xf32, #tpu.memory_space<vmem>>, vector<48x32xf32>
    %cst = arith.constant dense<0.000000e+00> : vector<16x32xf32>
    %5 = tpu.matmul %1, %4, %cst {dimension_numbers = #tpu.dot_dimension_numbers<[1], [0], [0], [1], [0, 0, 1, 1], [], []>} : vector<16x48xf32>, vector<48x32xf32>, vector<16x32xf32> -> vector<16x32xf32>
    %c0_7 = arith.constant 0 : index
    %c0_8 = arith.constant 0 : index
    %6 = vector.load %arg7[%c0_7, %c0_8] : memref<14x32xf32, #tpu.memory_space<vmem>>, vector<1x32xf32>
    %7 = vector.broadcast %6 : vector<1x32xf32> to vector<16x32xf32>
    %8 = arith.addf %5, %7 : vector<16x32xf32>
    %c0_9 = arith.constant 0 : index
    %c0_10 = arith.constant 0 : index
    %9 = vector.load %arg4[%c0_9, %c0_10] : memref<40x32xf32, #tpu.memory_space<vmem>>, vector<40x32xf32>
    %cst_11 = arith.constant dense<0.000000e+00> : vector<32x32xf32>
    %10 = tpu.matmul %3, %9, %cst_11 {dimension_numbers = #tpu.dot_dimension_numbers<[1], [0], [0], [1], [0, 0, 1, 1], [], []>} : vector<32x40xf32>, vector<40x32xf32>, vector<32x32xf32> -> vector<32x32xf32>
    %c1 = arith.constant 1 : index
    %c0_12 = arith.constant 0 : index
    %11 = vector.load %arg7[%c1, %c0_12] : memref<14x32xf32, #tpu.memory_space<vmem>>, vector<1x32xf32>
    %12 = vector.broadcast %11 : vector<1x32xf32> to vector<32x32xf32>
    %13 = arith.addf %10, %12 : vector<32x32xf32>
    %c0_13 = arith.constant 0 : index
    %c0_14 = arith.constant 0 : index
    %c0_15 = arith.constant 0 : index
    %14 = vector.load %arg5[%c0_13, %c0_14, %c0_15] : memref<2x32x96xf32, #tpu.memory_space<vmem>>, vector<1x32x96xf32>
    %15 = vector.shape_cast %14 : vector<1x32x96xf32> to vector<32x96xf32>
    %cst_16 = arith.constant dense<0.000000e+00> : vector<16x96xf32>
    %16 = tpu.matmul %8, %15, %cst_16 {dimension_numbers = #tpu.dot_dimension_numbers<[1], [0], [0], [1], [0, 0, 1, 1], [], []>} : vector<16x32xf32>, vector<32x96xf32>, vector<16x96xf32> -> vector<16x96xf32>
    %c1_17 = arith.constant 1 : index
    %c0_18 = arith.constant 0 : index
    %c0_19 = arith.constant 0 : index
    %17 = vector.load %arg5[%c1_17, %c0_18, %c0_19] : memref<2x32x96xf32, #tpu.memory_space<vmem>>, vector<1x32x96xf32>
    %18 = vector.shape_cast %17 : vector<1x32x96xf32> to vector<32x96xf32>
    %cst_20 = arith.constant dense<0.000000e+00> : vector<32x96xf32>
    %19 = tpu.matmul %13, %18, %cst_20 {dimension_numbers = #tpu.dot_dimension_numbers<[1], [0], [0], [1], [0, 0, 1, 1], [], []>} : vector<32x32xf32>, vector<32x96xf32>, vector<32x96xf32> -> vector<32x96xf32>
    %20 = vector.extract_strided_slice %16 {offsets = [0, 0], sizes = [16, 32], strides = [1, 1]} : vector<16x96xf32> to vector<16x32xf32>
    %c2 = arith.constant 2 : index
    %c0_21 = arith.constant 0 : index
    %21 = vector.load %arg7[%c2, %c0_21] : memref<14x32xf32, #tpu.memory_space<vmem>>, vector<1x32xf32>
    %22 = vector.broadcast %21 : vector<1x32xf32> to vector<16x32xf32>
    %23 = arith.addf %20, %22 : vector<16x32xf32>
    %24 = vector.extract_strided_slice %16 {offsets = [0, 32], sizes = [16, 32], strides = [1, 1]} : vector<16x96xf32> to vector<16x32xf32>
    %c3 = arith.constant 3 : index
    %c0_22 = arith.constant 0 : index
    %25 = vector.load %arg7[%c3, %c0_22] : memref<14x32xf32, #tpu.memory_space<vmem>>, vector<1x32xf32>
    %26 = vector.broadcast %25 : vector<1x32xf32> to vector<16x32xf32>
    %27 = arith.addf %24, %26 : vector<16x32xf32>
    %28 = vector.extract_strided_slice %16 {offsets = [0, 64], sizes = [16, 32], strides = [1, 1]} : vector<16x96xf32> to vector<16x32xf32>
    %c4 = arith.constant 4 : index
    %c0_23 = arith.constant 0 : index
    %29 = vector.load %arg7[%c4, %c0_23] : memref<14x32xf32, #tpu.memory_space<vmem>>, vector<1x32xf32>
    %30 = vector.broadcast %29 : vector<1x32xf32> to vector<16x32xf32>
    %31 = arith.addf %28, %30 : vector<16x32xf32>
    %32 = vector.extract_strided_slice %19 {offsets = [0, 0], sizes = [32, 32], strides = [1, 1]} : vector<32x96xf32> to vector<32x32xf32>
    %c5 = arith.constant 5 : index
    %c0_24 = arith.constant 0 : index
    %33 = vector.load %arg7[%c5, %c0_24] : memref<14x32xf32, #tpu.memory_space<vmem>>, vector<1x32xf32>
    %34 = vector.broadcast %33 : vector<1x32xf32> to vector<32x32xf32>
    %35 = arith.addf %32, %34 : vector<32x32xf32>
    %36 = vector.extract_strided_slice %19 {offsets = [0, 32], sizes = [32, 32], strides = [1, 1]} : vector<32x96xf32> to vector<32x32xf32>
    %c6 = arith.constant 6 : index
    %c0_25 = arith.constant 0 : index
    %37 = vector.load %arg7[%c6, %c0_25] : memref<14x32xf32, #tpu.memory_space<vmem>>, vector<1x32xf32>
    %38 = vector.broadcast %37 : vector<1x32xf32> to vector<32x32xf32>
    %39 = arith.addf %36, %38 : vector<32x32xf32>
    %40 = vector.extract_strided_slice %19 {offsets = [0, 64], sizes = [32, 32], strides = [1, 1]} : vector<32x96xf32> to vector<32x32xf32>
    %c7 = arith.constant 7 : index
    %c0_26 = arith.constant 0 : index
    %41 = vector.load %arg7[%c7, %c0_26] : memref<14x32xf32, #tpu.memory_space<vmem>>, vector<1x32xf32>
    %42 = vector.broadcast %41 : vector<1x32xf32> to vector<32x32xf32>
    %43 = arith.addf %40, %42 : vector<32x32xf32>
    %c0_27 = arith.constant 0 : index
    %c0_28 = arith.constant 0 : index
    %44 = vector.load %arg8[%c0_27, %c0_28] : memref<18x32xf32, #tpu.memory_space<vmem>>, vector<16x32xf32>
    %c16 = arith.constant 16 : index
    %c0_29 = arith.constant 0 : index
    %45 = vector.load %arg8[%c16, %c0_29] : memref<18x32xf32, #tpu.memory_space<vmem>>, vector<2x32xf32>
    %c0_30 = arith.constant 0 : index
    %c0_31 = arith.constant 0 : index
    %46 = vector.load %arg9[%c0_30, %c0_31] : memref<34x16xf32, #tpu.memory_space<vmem>>, vector<32x16xf32>
    %c32 = arith.constant 32 : index
    %c0_32 = arith.constant 0 : index
    %47 = vector.load %arg9[%c32, %c0_32] : memref<34x16xf32, #tpu.memory_space<vmem>>, vector<2x16xf32>
    %c0_33 = arith.constant 0 : index
    %c0_34 = arith.constant 0 : index
    %c0_35 = arith.constant 0 : index
    %48 = vector.load %arg6[%c0_33, %c0_34, %c0_35] : memref<2x32x32xf32, #tpu.memory_space<vmem>>, vector<1x32x32xf32>
    %49 = vector.shape_cast %48 : vector<1x32x32xf32> to vector<32x32xf32>
    %c8 = arith.constant 8 : index
    %c0_36 = arith.constant 0 : index
    %50 = vector.load %arg7[%c8, %c0_36] : memref<14x32xf32, #tpu.memory_space<vmem>>, vector<1x32xf32>
    %51 = vector.extract_strided_slice %23 {offsets = [0, 0], sizes = [16, 8], strides = [1, 1]} : vector<16x32xf32> to vector<16x8xf32>
    %52 = vector.extract_strided_slice %35 {offsets = [0, 0], sizes = [32, 8], strides = [1, 1]} : vector<32x32xf32> to vector<32x8xf32>
    %53 = vector.extract_strided_slice %39 {offsets = [0, 0], sizes = [32, 8], strides = [1, 1]} : vector<32x32xf32> to vector<32x8xf32>
    %cst_37 = arith.constant dense<0.000000e+00> : vector<16x32xf32>
    %54 = tpu.matmul %51, %52, %cst_37 {dimension_numbers = #tpu.dot_dimension_numbers<[1], [1], [0], [0], [0, 0, 1, 0], [], []>} : vector<16x8xf32>, vector<32x8xf32>, vector<16x32xf32> -> vector<16x32xf32>
    %55 = arith.addf %54, %44 : vector<16x32xf32>
    %cst_38 = arith.constant dense<0xFF800000> : vector<16xf32>
    %56 = vector.multi_reduction <maximumf>, %55, %cst_38 [1] : vector<16x32xf32> to vector<16xf32>
    %57 = vector.shape_cast %56 : vector<16xf32> to vector<16x1xf32>
    %58 = vector.broadcast %57 : vector<16x1xf32> to vector<16x32xf32>
    %59 = arith.subf %55, %58 : vector<16x32xf32>
    %60 = math.exp %59 : vector<16x32xf32>
    %cst_39 = arith.constant dense<0.000000e+00> : vector<16xf32>
    %61 = vector.multi_reduction <add>, %60, %cst_39 [1] : vector<16x32xf32> to vector<16xf32>
    %62 = vector.shape_cast %61 : vector<16xf32> to vector<16x1xf32>
    %63 = tpu.reciprocal %62 : vector<16x1xf32> -> vector<16x1xf32>
    %64 = vector.broadcast %63 : vector<16x1xf32> to vector<16x32xf32>
    %65 = arith.mulf %60, %64 : vector<16x32xf32>
    %cst_40 = arith.constant dense<0.000000e+00> : vector<16x8xf32>
    %66 = tpu.matmul %65, %53, %cst_40 {dimension_numbers = #tpu.dot_dimension_numbers<[1], [0], [0], [1], [0, 0, 1, 1], [], []>} : vector<16x32xf32>, vector<32x8xf32>, vector<16x8xf32> -> vector<16x8xf32>
    %67 = vector.extract_strided_slice %23 {offsets = [0, 8], sizes = [16, 8], strides = [1, 1]} : vector<16x32xf32> to vector<16x8xf32>
    %68 = vector.extract_strided_slice %35 {offsets = [0, 8], sizes = [32, 8], strides = [1, 1]} : vector<32x32xf32> to vector<32x8xf32>
    %69 = vector.extract_strided_slice %39 {offsets = [0, 8], sizes = [32, 8], strides = [1, 1]} : vector<32x32xf32> to vector<32x8xf32>
    %cst_41 = arith.constant dense<0.000000e+00> : vector<16x32xf32>
    %70 = tpu.matmul %67, %68, %cst_41 {dimension_numbers = #tpu.dot_dimension_numbers<[1], [1], [0], [0], [0, 0, 1, 0], [], []>} : vector<16x8xf32>, vector<32x8xf32>, vector<16x32xf32> -> vector<16x32xf32>
    %71 = arith.addf %70, %44 : vector<16x32xf32>
    %cst_42 = arith.constant dense<0xFF800000> : vector<16xf32>
    %72 = vector.multi_reduction <maximumf>, %71, %cst_42 [1] : vector<16x32xf32> to vector<16xf32>
    %73 = vector.shape_cast %72 : vector<16xf32> to vector<16x1xf32>
    %74 = vector.broadcast %73 : vector<16x1xf32> to vector<16x32xf32>
    %75 = arith.subf %71, %74 : vector<16x32xf32>
    %76 = math.exp %75 : vector<16x32xf32>
    %cst_43 = arith.constant dense<0.000000e+00> : vector<16xf32>
    %77 = vector.multi_reduction <add>, %76, %cst_43 [1] : vector<16x32xf32> to vector<16xf32>
    %78 = vector.shape_cast %77 : vector<16xf32> to vector<16x1xf32>
    %79 = tpu.reciprocal %78 : vector<16x1xf32> -> vector<16x1xf32>
    %80 = vector.broadcast %79 : vector<16x1xf32> to vector<16x32xf32>
    %81 = arith.mulf %76, %80 : vector<16x32xf32>
    %cst_44 = arith.constant dense<0.000000e+00> : vector<16x8xf32>
    %82 = tpu.matmul %81, %69, %cst_44 {dimension_numbers = #tpu.dot_dimension_numbers<[1], [0], [0], [1], [0, 0, 1, 1], [], []>} : vector<16x32xf32>, vector<32x8xf32>, vector<16x8xf32> -> vector<16x8xf32>
    %83 = vector.extract_strided_slice %23 {offsets = [0, 16], sizes = [16, 8], strides = [1, 1]} : vector<16x32xf32> to vector<16x8xf32>
    %84 = vector.extract_strided_slice %35 {offsets = [0, 16], sizes = [32, 8], strides = [1, 1]} : vector<32x32xf32> to vector<32x8xf32>
    %85 = vector.extract_strided_slice %39 {offsets = [0, 16], sizes = [32, 8], strides = [1, 1]} : vector<32x32xf32> to vector<32x8xf32>
    %cst_45 = arith.constant dense<0.000000e+00> : vector<16x32xf32>
    %86 = tpu.matmul %83, %84, %cst_45 {dimension_numbers = #tpu.dot_dimension_numbers<[1], [1], [0], [0], [0, 0, 1, 0], [], []>} : vector<16x8xf32>, vector<32x8xf32>, vector<16x32xf32> -> vector<16x32xf32>
    %87 = arith.addf %86, %44 : vector<16x32xf32>
    %cst_46 = arith.constant dense<0xFF800000> : vector<16xf32>
    %88 = vector.multi_reduction <maximumf>, %87, %cst_46 [1] : vector<16x32xf32> to vector<16xf32>
    %89 = vector.shape_cast %88 : vector<16xf32> to vector<16x1xf32>
    %90 = vector.broadcast %89 : vector<16x1xf32> to vector<16x32xf32>
    %91 = arith.subf %87, %90 : vector<16x32xf32>
    %92 = math.exp %91 : vector<16x32xf32>
    %cst_47 = arith.constant dense<0.000000e+00> : vector<16xf32>
    %93 = vector.multi_reduction <add>, %92, %cst_47 [1] : vector<16x32xf32> to vector<16xf32>
    %94 = vector.shape_cast %93 : vector<16xf32> to vector<16x1xf32>
    %95 = tpu.reciprocal %94 : vector<16x1xf32> -> vector<16x1xf32>
    %96 = vector.broadcast %95 : vector<16x1xf32> to vector<16x32xf32>
    %97 = arith.mulf %92, %96 : vector<16x32xf32>
    %cst_48 = arith.constant dense<0.000000e+00> : vector<16x8xf32>
    %98 = tpu.matmul %97, %85, %cst_48 {dimension_numbers = #tpu.dot_dimension_numbers<[1], [0], [0], [1], [0, 0, 1, 1], [], []>} : vector<16x32xf32>, vector<32x8xf32>, vector<16x8xf32> -> vector<16x8xf32>
    %99 = vector.extract_strided_slice %23 {offsets = [0, 24], sizes = [16, 8], strides = [1, 1]} : vector<16x32xf32> to vector<16x8xf32>
    %100 = vector.extract_strided_slice %35 {offsets = [0, 24], sizes = [32, 8], strides = [1, 1]} : vector<32x32xf32> to vector<32x8xf32>
    %101 = vector.extract_strided_slice %39 {offsets = [0, 24], sizes = [32, 8], strides = [1, 1]} : vector<32x32xf32> to vector<32x8xf32>
    %cst_49 = arith.constant dense<0.000000e+00> : vector<16x32xf32>
    %102 = tpu.matmul %99, %100, %cst_49 {dimension_numbers = #tpu.dot_dimension_numbers<[1], [1], [0], [0], [0, 0, 1, 0], [], []>} : vector<16x8xf32>, vector<32x8xf32>, vector<16x32xf32> -> vector<16x32xf32>
    %103 = arith.addf %102, %44 : vector<16x32xf32>
    %cst_50 = arith.constant dense<0xFF800000> : vector<16xf32>
    %104 = vector.multi_reduction <maximumf>, %103, %cst_50 [1] : vector<16x32xf32> to vector<16xf32>
    %105 = vector.shape_cast %104 : vector<16xf32> to vector<16x1xf32>
    %106 = vector.broadcast %105 : vector<16x1xf32> to vector<16x32xf32>
    %107 = arith.subf %103, %106 : vector<16x32xf32>
    %108 = math.exp %107 : vector<16x32xf32>
    %cst_51 = arith.constant dense<0.000000e+00> : vector<16xf32>
    %109 = vector.multi_reduction <add>, %108, %cst_51 [1] : vector<16x32xf32> to vector<16xf32>
    %110 = vector.shape_cast %109 : vector<16xf32> to vector<16x1xf32>
    %111 = tpu.reciprocal %110 : vector<16x1xf32> -> vector<16x1xf32>
    %112 = vector.broadcast %111 : vector<16x1xf32> to vector<16x32xf32>
    %113 = arith.mulf %108, %112 : vector<16x32xf32>
    %cst_52 = arith.constant dense<0.000000e+00> : vector<16x8xf32>
    %114 = tpu.matmul %113, %101, %cst_52 {dimension_numbers = #tpu.dot_dimension_numbers<[1], [0], [0], [1], [0, 0, 1, 1], [], []>} : vector<16x32xf32>, vector<32x8xf32>, vector<16x8xf32> -> vector<16x8xf32>
    %115 = tpu.concatenate %66, %82, %98, %114 in 1 : vector<16x8xf32>, vector<16x8xf32>, vector<16x8xf32>, vector<16x8xf32> -> vector<16x32xf32>
    %cst_53 = arith.constant dense<0.000000e+00> : vector<16x32xf32>
    %116 = tpu.matmul %115, %49, %cst_53 {dimension_numbers = #tpu.dot_dimension_numbers<[1], [0], [0], [1], [0, 0, 1, 1], [], []>} : vector<16x32xf32>, vector<32x32xf32>, vector<16x32xf32> -> vector<16x32xf32>
    %117 = vector.broadcast %50 : vector<1x32xf32> to vector<16x32xf32>
    %118 = arith.addf %116, %117 : vector<16x32xf32>
    %119 = arith.addf %8, %118 : vector<16x32xf32>
    %c10 = arith.constant 10 : index
    %c0_54 = arith.constant 0 : index
    %120 = vector.load %arg7[%c10, %c0_54] : memref<14x32xf32, #tpu.memory_space<vmem>>, vector<1x32xf32>
    %c11 = arith.constant 11 : index
    %c0_55 = arith.constant 0 : index
    %121 = vector.load %arg7[%c11, %c0_55] : memref<14x32xf32, #tpu.memory_space<vmem>>, vector<1x32xf32>
    %cst_56 = arith.constant dense<0.000000e+00> : vector<16xf32>
    %122 = vector.multi_reduction <add>, %119, %cst_56 [1] : vector<16x32xf32> to vector<16xf32>
    %123 = vector.shape_cast %122 : vector<16xf32> to vector<16x1xf32>
    %cst_57 = arith.constant 3.200000e+01 : f32
    %124 = vector.broadcast %cst_57 : f32 to vector<16x1xf32>
    %125 = arith.divf %123, %124 : vector<16x1xf32>
    %126 = vector.broadcast %125 : vector<16x1xf32> to vector<16x32xf32>
    %127 = arith.subf %119, %126 : vector<16x32xf32>
    %128 = arith.mulf %127, %127 : vector<16x32xf32>
    %cst_58 = arith.constant dense<0.000000e+00> : vector<16xf32>
    %129 = vector.multi_reduction <add>, %128, %cst_58 [1] : vector<16x32xf32> to vector<16xf32>
    %130 = vector.shape_cast %129 : vector<16xf32> to vector<16x1xf32>
    %cst_59 = arith.constant 3.200000e+01 : f32
    %131 = vector.broadcast %cst_59 : f32 to vector<16x1xf32>
    %132 = arith.divf %130, %131 : vector<16x1xf32>
    %133 = vector.broadcast %125 : vector<16x1xf32> to vector<16x32xf32>
    %134 = arith.subf %119, %133 : vector<16x32xf32>
    %cst_60 = arith.constant 9.99999974E-6 : f32
    %135 = vector.broadcast %cst_60 : f32 to vector<16x1xf32>
    %136 = arith.addf %132, %135 : vector<16x1xf32>
    %137 = math.rsqrt %136 : vector<16x1xf32>
    %138 = vector.broadcast %137 : vector<16x1xf32> to vector<16x32xf32>
    %139 = arith.mulf %134, %138 : vector<16x32xf32>
    %140 = vector.broadcast %120 : vector<1x32xf32> to vector<16x32xf32>
    %141 = arith.mulf %139, %140 : vector<16x32xf32>
    %142 = vector.broadcast %121 : vector<1x32xf32> to vector<16x32xf32>
    %143 = arith.addf %141, %142 : vector<16x32xf32>
    %c1_61 = arith.constant 1 : index
    %c0_62 = arith.constant 0 : index
    %c0_63 = arith.constant 0 : index
    %144 = vector.load %arg6[%c1_61, %c0_62, %c0_63] : memref<2x32x32xf32, #tpu.memory_space<vmem>>, vector<1x32x32xf32>
    %145 = vector.shape_cast %144 : vector<1x32x32xf32> to vector<32x32xf32>
    %c9 = arith.constant 9 : index
    %c0_64 = arith.constant 0 : index
    %146 = vector.load %arg7[%c9, %c0_64] : memref<14x32xf32, #tpu.memory_space<vmem>>, vector<1x32xf32>
    %147 = vector.extract_strided_slice %43 {offsets = [0, 0], sizes = [32, 8], strides = [1, 1]} : vector<32x32xf32> to vector<32x8xf32>
    %148 = vector.extract_strided_slice %27 {offsets = [0, 0], sizes = [16, 8], strides = [1, 1]} : vector<16x32xf32> to vector<16x8xf32>
    %149 = vector.extract_strided_slice %31 {offsets = [0, 0], sizes = [16, 8], strides = [1, 1]} : vector<16x32xf32> to vector<16x8xf32>
    %cst_65 = arith.constant dense<0.000000e+00> : vector<32x16xf32>
    %150 = tpu.matmul %147, %148, %cst_65 {dimension_numbers = #tpu.dot_dimension_numbers<[1], [1], [0], [0], [0, 0, 1, 0], [], []>} : vector<32x8xf32>, vector<16x8xf32>, vector<32x16xf32> -> vector<32x16xf32>
    %151 = arith.addf %150, %46 : vector<32x16xf32>
    %cst_66 = arith.constant dense<0xFF800000> : vector<32xf32>
    %152 = vector.multi_reduction <maximumf>, %151, %cst_66 [1] : vector<32x16xf32> to vector<32xf32>
    %153 = vector.shape_cast %152 : vector<32xf32> to vector<32x1xf32>
    %154 = vector.broadcast %153 : vector<32x1xf32> to vector<32x16xf32>
    %155 = arith.subf %151, %154 : vector<32x16xf32>
    %156 = math.exp %155 : vector<32x16xf32>
    %cst_67 = arith.constant dense<0.000000e+00> : vector<32xf32>
    %157 = vector.multi_reduction <add>, %156, %cst_67 [1] : vector<32x16xf32> to vector<32xf32>
    %158 = vector.shape_cast %157 : vector<32xf32> to vector<32x1xf32>
    %159 = tpu.reciprocal %158 : vector<32x1xf32> -> vector<32x1xf32>
    %160 = vector.broadcast %159 : vector<32x1xf32> to vector<32x16xf32>
    %161 = arith.mulf %156, %160 : vector<32x16xf32>
    %cst_68 = arith.constant dense<0.000000e+00> : vector<32x8xf32>
    %162 = tpu.matmul %161, %149, %cst_68 {dimension_numbers = #tpu.dot_dimension_numbers<[1], [0], [0], [1], [0, 0, 1, 1], [], []>} : vector<32x16xf32>, vector<16x8xf32>, vector<32x8xf32> -> vector<32x8xf32>
    %163 = vector.extract_strided_slice %43 {offsets = [0, 8], sizes = [32, 8], strides = [1, 1]} : vector<32x32xf32> to vector<32x8xf32>
    %164 = vector.extract_strided_slice %27 {offsets = [0, 8], sizes = [16, 8], strides = [1, 1]} : vector<16x32xf32> to vector<16x8xf32>
    %165 = vector.extract_strided_slice %31 {offsets = [0, 8], sizes = [16, 8], strides = [1, 1]} : vector<16x32xf32> to vector<16x8xf32>
    %cst_69 = arith.constant dense<0.000000e+00> : vector<32x16xf32>
    %166 = tpu.matmul %163, %164, %cst_69 {dimension_numbers = #tpu.dot_dimension_numbers<[1], [1], [0], [0], [0, 0, 1, 0], [], []>} : vector<32x8xf32>, vector<16x8xf32>, vector<32x16xf32> -> vector<32x16xf32>
    %167 = arith.addf %166, %46 : vector<32x16xf32>
    %cst_70 = arith.constant dense<0xFF800000> : vector<32xf32>
    %168 = vector.multi_reduction <maximumf>, %167, %cst_70 [1] : vector<32x16xf32> to vector<32xf32>
    %169 = vector.shape_cast %168 : vector<32xf32> to vector<32x1xf32>
    %170 = vector.broadcast %169 : vector<32x1xf32> to vector<32x16xf32>
    %171 = arith.subf %167, %170 : vector<32x16xf32>
    %172 = math.exp %171 : vector<32x16xf32>
    %cst_71 = arith.constant dense<0.000000e+00> : vector<32xf32>
    %173 = vector.multi_reduction <add>, %172, %cst_71 [1] : vector<32x16xf32> to vector<32xf32>
    %174 = vector.shape_cast %173 : vector<32xf32> to vector<32x1xf32>
    %175 = tpu.reciprocal %174 : vector<32x1xf32> -> vector<32x1xf32>
    %176 = vector.broadcast %175 : vector<32x1xf32> to vector<32x16xf32>
    %177 = arith.mulf %172, %176 : vector<32x16xf32>
    %cst_72 = arith.constant dense<0.000000e+00> : vector<32x8xf32>
    %178 = tpu.matmul %177, %165, %cst_72 {dimension_numbers = #tpu.dot_dimension_numbers<[1], [0], [0], [1], [0, 0, 1, 1], [], []>} : vector<32x16xf32>, vector<16x8xf32>, vector<32x8xf32> -> vector<32x8xf32>
    %179 = vector.extract_strided_slice %43 {offsets = [0, 16], sizes = [32, 8], strides = [1, 1]} : vector<32x32xf32> to vector<32x8xf32>
    %180 = vector.extract_strided_slice %27 {offsets = [0, 16], sizes = [16, 8], strides = [1, 1]} : vector<16x32xf32> to vector<16x8xf32>
    %181 = vector.extract_strided_slice %31 {offsets = [0, 16], sizes = [16, 8], strides = [1, 1]} : vector<16x32xf32> to vector<16x8xf32>
    %cst_73 = arith.constant dense<0.000000e+00> : vector<32x16xf32>
    %182 = tpu.matmul %179, %180, %cst_73 {dimension_numbers = #tpu.dot_dimension_numbers<[1], [1], [0], [0], [0, 0, 1, 0], [], []>} : vector<32x8xf32>, vector<16x8xf32>, vector<32x16xf32> -> vector<32x16xf32>
    %183 = arith.addf %182, %46 : vector<32x16xf32>
    %cst_74 = arith.constant dense<0xFF800000> : vector<32xf32>
    %184 = vector.multi_reduction <maximumf>, %183, %cst_74 [1] : vector<32x16xf32> to vector<32xf32>
    %185 = vector.shape_cast %184 : vector<32xf32> to vector<32x1xf32>
    %186 = vector.broadcast %185 : vector<32x1xf32> to vector<32x16xf32>
    %187 = arith.subf %183, %186 : vector<32x16xf32>
    %188 = math.exp %187 : vector<32x16xf32>
    %cst_75 = arith.constant dense<0.000000e+00> : vector<32xf32>
    %189 = vector.multi_reduction <add>, %188, %cst_75 [1] : vector<32x16xf32> to vector<32xf32>
    %190 = vector.shape_cast %189 : vector<32xf32> to vector<32x1xf32>
    %191 = tpu.reciprocal %190 : vector<32x1xf32> -> vector<32x1xf32>
    %192 = vector.broadcast %191 : vector<32x1xf32> to vector<32x16xf32>
    %193 = arith.mulf %188, %192 : vector<32x16xf32>
    %cst_76 = arith.constant dense<0.000000e+00> : vector<32x8xf32>
    %194 = tpu.matmul %193, %181, %cst_76 {dimension_numbers = #tpu.dot_dimension_numbers<[1], [0], [0], [1], [0, 0, 1, 1], [], []>} : vector<32x16xf32>, vector<16x8xf32>, vector<32x8xf32> -> vector<32x8xf32>
    %195 = vector.extract_strided_slice %43 {offsets = [0, 24], sizes = [32, 8], strides = [1, 1]} : vector<32x32xf32> to vector<32x8xf32>
    %196 = vector.extract_strided_slice %27 {offsets = [0, 24], sizes = [16, 8], strides = [1, 1]} : vector<16x32xf32> to vector<16x8xf32>
    %197 = vector.extract_strided_slice %31 {offsets = [0, 24], sizes = [16, 8], strides = [1, 1]} : vector<16x32xf32> to vector<16x8xf32>
    %cst_77 = arith.constant dense<0.000000e+00> : vector<32x16xf32>
    %198 = tpu.matmul %195, %196, %cst_77 {dimension_numbers = #tpu.dot_dimension_numbers<[1], [1], [0], [0], [0, 0, 1, 0], [], []>} : vector<32x8xf32>, vector<16x8xf32>, vector<32x16xf32> -> vector<32x16xf32>
    %199 = arith.addf %198, %46 : vector<32x16xf32>
    %cst_78 = arith.constant dense<0xFF800000> : vector<32xf32>
    %200 = vector.multi_reduction <maximumf>, %199, %cst_78 [1] : vector<32x16xf32> to vector<32xf32>
    %201 = vector.shape_cast %200 : vector<32xf32> to vector<32x1xf32>
    %202 = vector.broadcast %201 : vector<32x1xf32> to vector<32x16xf32>
    %203 = arith.subf %199, %202 : vector<32x16xf32>
    %204 = math.exp %203 : vector<32x16xf32>
    %cst_79 = arith.constant dense<0.000000e+00> : vector<32xf32>
    %205 = vector.multi_reduction <add>, %204, %cst_79 [1] : vector<32x16xf32> to vector<32xf32>
    %206 = vector.shape_cast %205 : vector<32xf32> to vector<32x1xf32>
    %207 = tpu.reciprocal %206 : vector<32x1xf32> -> vector<32x1xf32>
    %208 = vector.broadcast %207 : vector<32x1xf32> to vector<32x16xf32>
    %209 = arith.mulf %204, %208 : vector<32x16xf32>
    %cst_80 = arith.constant dense<0.000000e+00> : vector<32x8xf32>
    %210 = tpu.matmul %209, %197, %cst_80 {dimension_numbers = #tpu.dot_dimension_numbers<[1], [0], [0], [1], [0, 0, 1, 1], [], []>} : vector<32x16xf32>, vector<16x8xf32>, vector<32x8xf32> -> vector<32x8xf32>
    %211 = tpu.concatenate %162, %178, %194, %210 in 1 : vector<32x8xf32>, vector<32x8xf32>, vector<32x8xf32>, vector<32x8xf32> -> vector<32x32xf32>
    %cst_81 = arith.constant dense<0.000000e+00> : vector<32x32xf32>
    %212 = tpu.matmul %211, %145, %cst_81 {dimension_numbers = #tpu.dot_dimension_numbers<[1], [0], [0], [1], [0, 0, 1, 1], [], []>} : vector<32x32xf32>, vector<32x32xf32>, vector<32x32xf32> -> vector<32x32xf32>
    %213 = vector.broadcast %146 : vector<1x32xf32> to vector<32x32xf32>
    %214 = arith.addf %212, %213 : vector<32x32xf32>
    %215 = arith.addf %13, %214 : vector<32x32xf32>
    %c12 = arith.constant 12 : index
    %c0_82 = arith.constant 0 : index
    %216 = vector.load %arg7[%c12, %c0_82] : memref<14x32xf32, #tpu.memory_space<vmem>>, vector<1x32xf32>
    %c13 = arith.constant 13 : index
    %c0_83 = arith.constant 0 : index
    %217 = vector.load %arg7[%c13, %c0_83] : memref<14x32xf32, #tpu.memory_space<vmem>>, vector<1x32xf32>
    %cst_84 = arith.constant dense<0.000000e+00> : vector<32xf32>
    %218 = vector.multi_reduction <add>, %215, %cst_84 [1] : vector<32x32xf32> to vector<32xf32>
    %219 = vector.shape_cast %218 : vector<32xf32> to vector<32x1xf32>
    %cst_85 = arith.constant 3.200000e+01 : f32
    %220 = vector.broadcast %cst_85 : f32 to vector<32x1xf32>
    %221 = arith.divf %219, %220 : vector<32x1xf32>
    %222 = vector.broadcast %221 : vector<32x1xf32> to vector<32x32xf32>
    %223 = arith.subf %215, %222 : vector<32x32xf32>
    %224 = arith.mulf %223, %223 : vector<32x32xf32>
    %cst_86 = arith.constant dense<0.000000e+00> : vector<32xf32>
    %225 = vector.multi_reduction <add>, %224, %cst_86 [1] : vector<32x32xf32> to vector<32xf32>
    %226 = vector.shape_cast %225 : vector<32xf32> to vector<32x1xf32>
    %cst_87 = arith.constant 3.200000e+01 : f32
    %227 = vector.broadcast %cst_87 : f32 to vector<32x1xf32>
    %228 = arith.divf %226, %227 : vector<32x1xf32>
    %229 = vector.broadcast %221 : vector<32x1xf32> to vector<32x32xf32>
    %230 = arith.subf %215, %229 : vector<32x32xf32>
    %cst_88 = arith.constant 9.99999974E-6 : f32
    %231 = vector.broadcast %cst_88 : f32 to vector<32x1xf32>
    %232 = arith.addf %228, %231 : vector<32x1xf32>
    %233 = math.rsqrt %232 : vector<32x1xf32>
    %234 = vector.broadcast %233 : vector<32x1xf32> to vector<32x32xf32>
    %235 = arith.mulf %230, %234 : vector<32x32xf32>
    %236 = vector.broadcast %216 : vector<1x32xf32> to vector<32x32xf32>
    %237 = arith.mulf %235, %236 : vector<32x32xf32>
    %238 = vector.broadcast %217 : vector<1x32xf32> to vector<32x32xf32>
    %239 = arith.addf %237, %238 : vector<32x32xf32>
    %cst_89 = arith.constant dense<0.000000e+00> : vector<2x32xf32>
    %240 = tpu.matmul %47, %143, %cst_89 {dimension_numbers = #tpu.dot_dimension_numbers<[1], [0], [0], [1], [0, 0, 1, 1], [], []>} : vector<2x16xf32>, vector<16x32xf32>, vector<2x32xf32> -> vector<2x32xf32>
    %cst_90 = arith.constant dense<0.000000e+00> : vector<2x32xf32>
    %241 = tpu.matmul %45, %239, %cst_90 {dimension_numbers = #tpu.dot_dimension_numbers<[1], [0], [0], [1], [0, 0, 1, 1], [], []>} : vector<2x32xf32>, vector<32x32xf32>, vector<2x32xf32> -> vector<2x32xf32>
    %242 = arith.addf %240, %241 : vector<2x32xf32>
    %c0_91 = arith.constant 0 : index
    %c0_92 = arith.constant 0 : index
    %243 = vector.load %arg10[%c0_91, %c0_92] : memref<2x32xf32, #tpu.memory_space<vmem>>, vector<2x32xf32>
    tpu.vector_store %arg10[%c0_91, %c0_92], %242 {strides = array<i32>} : memref<2x32xf32, #tpu.memory_space<vmem>>, vector<2x32xf32>,
    return
  }
  func.func @transform_0(%arg0: i32) -> (i32, i32, i32) {
    %c0_i32 = arith.constant 0 : i32
    %c0_i32_0 = arith.constant 0 : i32
    %c0_i32_1 = arith.constant 0 : i32
    return %arg0, %c0_i32, %c0_i32_0 : i32, i32, i32
  }
  func.func @transform_1(%arg0: i32) -> (i32, i32, i32) {
    %c0_i32 = arith.constant 0 : i32
    %c0_i32_0 = arith.constant 0 : i32
    %c0_i32_1 = arith.constant 0 : i32
    return %arg0, %c0_i32, %c0_i32_0 : i32, i32, i32
  }
  func.func @transform_2(%arg0: i32) -> (i32, i32) {
    %c0_i32 = arith.constant 0 : i32
    %c0_i32_0 = arith.constant 0 : i32
    %c0_i32_1 = arith.constant 0 : i32
    return %c0_i32, %c0_i32_0 : i32, i32
  }
  func.func @transform_3(%arg0: i32) -> (i32, i32) {
    %c0_i32 = arith.constant 0 : i32
    %c0_i32_0 = arith.constant 0 : i32
    %c0_i32_1 = arith.constant 0 : i32
    return %c0_i32, %c0_i32_0 : i32, i32
  }
  func.func @transform_4(%arg0: i32) -> (i32, i32, i32) {
    %c0_i32 = arith.constant 0 : i32
    %c0_i32_0 = arith.constant 0 : i32
    %c0_i32_1 = arith.constant 0 : i32
    %c0_i32_2 = arith.constant 0 : i32
    return %c0_i32, %c0_i32_0, %c0_i32_1 : i32, i32, i32
  }
  func.func @transform_5(%arg0: i32) -> (i32, i32, i32) {
    %c0_i32 = arith.constant 0 : i32
    %c0_i32_0 = arith.constant 0 : i32
    %c0_i32_1 = arith.constant 0 : i32
    %c0_i32_2 = arith.constant 0 : i32
    return %c0_i32, %c0_i32_0, %c0_i32_1 : i32, i32, i32
  }
  func.func @transform_6(%arg0: i32) -> (i32, i32) {
    %c0_i32 = arith.constant 0 : i32
    %c0_i32_0 = arith.constant 0 : i32
    %c0_i32_1 = arith.constant 0 : i32
    return %c0_i32, %c0_i32_0 : i32, i32
  }
  func.func @transform_7(%arg0: i32) -> (i32, i32) {
    %c0_i32 = arith.constant 0 : i32
    %c0_i32_0 = arith.constant 0 : i32
    %c0_i32_1 = arith.constant 0 : i32
    return %c0_i32, %c0_i32_0 : i32, i32
  }
  func.func @transform_8(%arg0: i32) -> (i32, i32) {
    %c0_i32 = arith.constant 0 : i32
    %c0_i32_0 = arith.constant 0 : i32
    %c0_i32_1 = arith.constant 0 : i32
    return %c0_i32, %c0_i32_0 : i32, i32
  }
  func.func @transform_9(%arg0: i32) -> (i32, i32) {
    %c0_i32 = arith.constant 0 : i32
    %c0_i32_0 = arith.constant 0 : i32
    return %arg0, %c0_i32 : i32, i32
  }
}

</mosaic_0001>

<llo_original>
// kernel: tpu_custom_call.1
$region0: #{tpu_custom_call.1}
  #allocation0 [shape = 'u32[]', space=smem, size = 0x4, offset = 0x4, fixed_abs, tag = 'smem constant byte address 0x4 - core index']
  #allocation1 [shape = 'u32[72,128]{1,0:T(1,128)}', space=vmem, size = 0x9000, scoped, tag = 'internal scratch']
  %s0 = inlined_call_operand.vmem [shape: f32[2,8,48], index: 0, kind: input, shape index: {}]
  %s1 = inlined_call_operand.vmem [shape: f32[2,16,40], index: 1, kind: input, shape index: {}]
  %s2 = inlined_call_operand.vmem [shape: f32[48,32], index: 2, kind: input, shape index: {}]
  %s3 = inlined_call_operand.vmem [shape: f32[40,32], index: 3, kind: input, shape index: {}]
  %s4 = inlined_call_operand.vmem [shape: f32[2,32,96], index: 4, kind: input, shape index: {}]
  %s5 = inlined_call_operand.vmem [shape: f32[2,32,32], index: 5, kind: input, shape index: {}]
  %s6 = inlined_call_operand.hbm [shape: f32[14,32], index: 6, kind: input, shape index: {}]
  %s7 = inlined_call_operand.hbm [shape: f32[18,32], index: 7, kind: input, shape index: {}]
  %s8 = inlined_call_operand.vmem [shape: f32[34,16], index: 8, kind: input, shape index: {}]
  %s9 = inlined_call_operand.hbm [shape: f32[2,32], index: 9, kind: output, shape index: {}]
  %s10 = sld [smem:[#allocation0]]
  $region54: #{tpu_custom_call.1} parent=0
    _
  %s12 = ssub.s32 1, %s10
  %s13 = scalar_select 0, %s12, %s10
  $region1: #{tpu_custom_call.1} parent=0
    #allocation2 [shape = 'u8[8192]{0}', space=vmem, size = 0x2000, scoped, tag = 'input window, operand 6, single buffered']
    #allocation3 [shape = 's32[1]{0}', space=sflag, size = 0x4, scoped, tag = 'scoped memory for tpu_custom_call.1']
    #allocation4 [shape = 's32[1]{0}', space=sflag, size = 0x4, scoped, tag = 'scoped memory for tpu_custom_call.1']
    #allocation5 [shape = 'u8[12288]{0}', space=vmem, size = 0x3000, scoped, tag = 'input window, operand 7, single buffered']
    #allocation6 [shape = 's32[1]{0}', space=sflag, size = 0x4, scoped, tag = 'scoped memory for tpu_custom_call.1']
    #allocation7 [shape = 'u8[1024]{0}', space=vmem, size = 0x400, scoped, tag = 'output window, operand 0, single buffered']
    %14 = vsyncpa [#allocation3], 0
    %15 = vsyncpa [#allocation6], 0
    %16 = vsyncpa [#allocation4], 0
    // Predicated region
    $region2: #{tpu_custom_call.1} parent=1 // pred_check
      _
    $region3: #{tpu_custom_call.1} parent=1 // pred_check_branch
      %18 = sbr.rel (0) target = $region5
    $region4: #{tpu_custom_call.1} parent=1 // pred_region
      _
    $region5: #{tpu_custom_call.1} parent=1 // pred_fallthru
      _
    // Predicated region
    $region6: #{tpu_custom_call.1} parent=1 // pred_check
      _
    $region7: #{tpu_custom_call.1} parent=1 // pred_check_branch
      %20 = sbr.rel (0) target = $region9
    $region8: #{tpu_custom_call.1} parent=1 // pred_region
      _
    $region9: #{tpu_custom_call.1} parent=1 // pred_fallthru
      _
    // Predicated region
    $region10: #{tpu_custom_call.1} parent=1 // pred_check
      _
    $region11: #{tpu_custom_call.1} parent=1 // pred_check_branch
      %22 = sbr.rel (0) target = $region13
    $region12: #{tpu_custom_call.1} parent=1 // pred_region
      _
    $region13: #{tpu_custom_call.1} parent=1 // pred_fallthru
      _
    // Predicated region
    $region14: #{tpu_custom_call.1} parent=1 // pred_check
      _
    $region15: #{tpu_custom_call.1} parent=1 // pred_check_branch
      %24 = sbr.rel (0) target = $region17
    $region16: #{tpu_custom_call.1} parent=1 // pred_region
      _
    $region17: #{tpu_custom_call.1} parent=1 // pred_fallthru
      _
    // Predicated region
    $region18: #{tpu_custom_call.1} parent=1 // pred_check
      _
    $region19: #{tpu_custom_call.1} parent=1 // pred_check_branch
      %26 = sbr.rel (0) target = $region21
    $region20: #{tpu_custom_call.1} parent=1 // pred_region
      _
    $region21: #{tpu_custom_call.1} parent=1 // pred_fallthru
      _
    // Predicated region
    $region22: #{tpu_custom_call.1} parent=1 // pred_check
      _
    $region23: #{tpu_custom_call.1} parent=1 // pred_check_branch
      %28 = sbr.rel (0) target = $region25
    $region24: #{tpu_custom_call.1} parent=1 // pred_region
      _
    $region25: #{tpu_custom_call.1} parent=1 // pred_fallthru
      _
    // Predicated region
    $region26: #{tpu_custom_call.1} parent=1 // pred_check
      _
    $region27: #{tpu_custom_call.1} parent=1 // pred_check_branch
      %30 = sbr.rel (0) target = $region29
    $region28: #{tpu_custom_call.1} parent=1 // pred_region
      %32 = vsyncadd [#allocation3], 0
      %s33 = sshll.u32 %s6, 4
      %s34 = int_to_ptr.hbm [resolvable:$true] %s33
      %s35 = sshll.u32 [#allocation2], 4
      %s36 = int_to_ptr.vmem [resolvable:$true] %s35
      %41 = dma.hbm_to_vmem [thread:$0]  %s34, 256, %s36, [#allocation3], 128, 128, 8
    $region29: #{tpu_custom_call.1} parent=1 // pred_fallthru
      _
    // Predicated region
    $region30: #{tpu_custom_call.1} parent=1 // pred_check
      _
    $region31: #{tpu_custom_call.1} parent=1 // pred_check_branch
      %43 = sbr.rel (0) target = $region33
    $region32: #{tpu_custom_call.1} parent=1 // pred_region
      %45 = vsyncadd [#allocation6], 0
      %s46 = sshll.u32 %s7, 4
      %s47 = int_to_ptr.hbm [resolvable:$true] %s46
      %s48 = sshll.u32 [#allocation5], 4
      %s49 = int_to_ptr.vmem [resolvable:$true] %s48
      %54 = dma.hbm_to_vmem [thread:$0]  %s47, 384, %s49, [#allocation6], 128, 128, 8
    $region33: #{tpu_custom_call.1} parent=1 // pred_fallthru
      _
    // Predicated region
    $region34: #{tpu_custom_call.1} parent=1 // pred_check
      _
    $region35: #{tpu_custom_call.1} parent=1 // pred_check_branch
      %56 = sbr.rel (0) target = $region37
    $region36: #{tpu_custom_call.1} parent=1 // pred_region
      _
    $region37: #{tpu_custom_call.1} parent=1 // pred_fallthru
      _
    // Predicated region
    $region38: #{tpu_custom_call.1} parent=1 // pred_check
      _
    $region39: #{tpu_custom_call.1} parent=1 // pred_check_branch
      %58 = sbr.rel (0) target = $region41
    $region40: #{tpu_custom_call.1} parent=1 // pred_region
      %60 = dma.done [#allocation3], 256
    $region41: #{tpu_custom_call.1} parent=1 // pred_fallthru
      _
    // Predicated region
    $region42: #{tpu_custom_call.1} parent=1 // pred_check
      _
    $region43: #{tpu_custom_call.1} parent=1 // pred_check_branch
      %62 = sbr.rel (0) target = $region45
    $region44: #{tpu_custom_call.1} parent=1 // pred_region
      %64 = dma.done [#allocation6], 384
    $region45: #{tpu_custom_call.1} parent=1 // pred_fallthru
      _
    %v65 = vld [vmem:[%s0] sm:$0xff]
    %v66 = vld [vmem:[%s0 + $0x8] sm:$0xff]
    %v67 = vld [vmem:[%s1] sm:$0xff]
    %v68 = vld [vmem:[%s1 + $0x8] sm:$0xff]
    %v69 = vld [vmem:[%s1 + $0x10] sm:$0xff]
    %v70 = vld [vmem:[%s1 + $0x18] sm:$0xff]
    %v71 = vld [vmem:[%s2] sm:$0xff]
    %v72 = vld [vmem:[%s2 + $0x8] sm:$0xff]
    %v73 = vld [vmem:[%s2 + $0x10] sm:$0xff]
    %v74 = vld [vmem:[%s2 + $0x18] sm:$0xff]
    %v75 = vld [vmem:[%s2 + $0x20] sm:$0xff]
    %v76 = vld [vmem:[%s2 + $0x28] sm:$0xff]
    %v77 = vld [vmem:[#allocation2] sm:$0x1]
    %v78 = vperm.slane %v77, 0
    %vm79 = vcmask 392192
    %v81 = vsel %vm79, %v65, 0
    %v84 = vsel %vm79, %v66, 0
    %86 = vmatpush.msra.mxu0 0.0
    %87 = vmatpush.msra.mxu0 0.0
    %88 = vmatpush.msra.mxu0 0.0
    %89 = vmatpush.msra.mxu0 0.0
    %90 = vmatpush.msra.mxu0 0.0
    %91 = vmatpush.msra.mxu0 0.0
    %92 = vmatpush.msra.mxu0 0.0
    %93 = vmatpush.msra.mxu0 0.0
    %94 = vmatpush.msra.mxu0 0.0
    %95 = vmatpush.msra.mxu0 0.0
    %96 = vmatpush.msra.mxu0 %v76
    %97 = vmatpush.msra.mxu0 %v75
    %98 = vmatpush.msra.mxu0 %v74
    %99 = vmatpush.msra.mxu0 %v73
    %100 = vmatpush.msra.mxu0 %v72
    %101 = vmatpush.msra.mxu0 %v71
    %102 = vmatmul.f32.gmra.mxu0 %v81
    %v103 = vpop.f32.mrf.mxu0
    %v104 = vadd.f32 %v78, %v103
    %105 = vmatmul.f32.gmra.mxu0 %v84
    %v106 = vpop.f32.mrf.mxu0
    %v107 = vadd.f32 %v78, %v106
    %108 = vdwg.mxu0
    %v109 = vld [vmem:[%s3] sm:$0xff]
    %v110 = vld [vmem:[%s3 + $0x8] sm:$0xff]
    %v111 = vld [vmem:[%s3 + $0x10] sm:$0xff]
    %v112 = vld [vmem:[%s3 + $0x18] sm:$0xff]
    %v113 = vld [vmem:[%s3 + $0x20] sm:$0xff]
    %v114 = vld [vmem:[#allocation2 + $0x1] sm:$0x1]
    %v115 = vperm.slane %v114, 0
    %vm116 = vcmask 326656
    %v118 = vsel %vm116, %v67, 0
    %v121 = vsel %vm116, %v68, 0
    %v124 = vsel %vm116, %v69, 0
    %v127 = vsel %vm116, %v70, 0
    %129 = vmatpush.msra.mxu0 0.0
    %130 = vmatpush.msra.mxu0 0.0
    %131 = vmatpush.msra.mxu0 0.0
    %132 = vmatpush.msra.mxu0 0.0
    %133 = vmatpush.msra.mxu0 0.0
    %134 = vmatpush.msra.mxu0 0.0
    %135 = vmatpush.msra.mxu0 0.0
    %136 = vmatpush.msra.mxu0 0.0
    %137 = vmatpush.msra.mxu0 0.0
    %138 = vmatpush.msra.mxu0 0.0
    %139 = vmatpush.msra.mxu0 0.0
    %140 = vmatpush.msra.mxu0 %v113
    %141 = vmatpush.msra.mxu0 %v112
    %142 = vmatpush.msra.mxu0 %v111
    %143 = vmatpush.msra.mxu0 %v110
    %144 = vmatpush.msra.mxu0 %v109
    %145 = vmatmul.f32.gmra.mxu0 %v118
    %v146 = vpop.f32.mrf.mxu0
    %v147 = vadd.f32 %v115, %v146
    %148 = vmatmul.f32.gmra.mxu0 %v121
    %v149 = vpop.f32.mrf.mxu0
    %v150 = vadd.f32 %v115, %v149
    %151 = vmatmul.f32.gmra.mxu0 %v124
    %v152 = vpop.f32.mrf.mxu0
    %v153 = vadd.f32 %v115, %v152
    %154 = vmatmul.f32.gmra.mxu0 %v127
    %v155 = vpop.f32.mrf.mxu0
    %v156 = vadd.f32 %v115, %v155
    %157 = vdwg.mxu0
    %v158 = vld [vmem:[%s4] sm:$0xff]
    %v159 = vld [vmem:[%s4 + $0x8] sm:$0xff]
    %v160 = vld [vmem:[%s4 + $0x10] sm:$0xff]
    %v161 = vld [vmem:[%s4 + $0x18] sm:$0xff]
    %vm162 = vcmask 261120
    %v164 = vsel %vm162, %v104, 0
    %v167 = vsel %vm162, %v107, 0
    %169 = vmatpush.msra.mxu0 0.0
    %170 = vmatpush.msra.mxu0 0.0
    %171 = vmatpush.msra.mxu0 0.0
    %172 = vmatpush.msra.mxu0 0.0
    %173 = vmatpush.msra.mxu0 0.0
    %174 = vmatpush.msra.mxu0 0.0
    %175 = vmatpush.msra.mxu0 0.0
    %176 = vmatpush.msra.mxu0 0.0
    %177 = vmatpush.msra.mxu0 0.0
    %178 = vmatpush.msra.mxu0 0.0
    %179 = vmatpush.msra.mxu0 0.0
    %180 = vmatpush.msra.mxu0 0.0
    %181 = vmatpush.msra.mxu0 %v161
    %182 = vmatpush.msra.mxu0 %v160
    %183 = vmatpush.msra.mxu0 %v159
    %184 = vmatpush.msra.mxu0 %v158
    %185 = vmatmul.f32.gmra.mxu0 %v164
    %v186 = vpop.f32.mrf.mxu0
    %v187 = vadd.f32 0.0, %v186
    %188 = vmatmul.f32.gmra.mxu0 %v167
    %v189 = vpop.f32.mrf.mxu0
    %v190 = vadd.f32 0.0, %v189
    %191 = vdwg.mxu0
    %s192 = scalar_lea.vmem %s4, 32
    %v193 = vld [vmem:[%s192] sm:$0xff]
    %v194 = vld [vmem:[%s192 + $0x8] sm:$0xff]
    %v195 = vld [vmem:[%s192 + $0x10] sm:$0xff]
    %v196 = vld [vmem:[%s192 + $0x18] sm:$0xff]
    %v198 = vsel %vm162, %v147, 0
    %v201 = vsel %vm162, %v150, 0
    %v204 = vsel %vm162, %v153, 0
    %v207 = vsel %vm162, %v156, 0
    %209 = vmatpush.msra.mxu0 0.0
    %210 = vmatpush.msra.mxu0 0.0
    %211 = vmatpush.msra.mxu0 0.0
    %212 = vmatpush.msra.mxu0 0.0
    %213 = vmatpush.msra.mxu0 0.0
    %214 = vmatpush.msra.mxu0 0.0
    %215 = vmatpush.msra.mxu0 0.0
    %216 = vmatpush.msra.mxu0 0.0
    %217 = vmatpush.msra.mxu0 0.0
    %218 = vmatpush.msra.mxu0 0.0
    %219 = vmatpush.msra.mxu0 0.0
    %220 = vmatpush.msra.mxu0 0.0
    %221 = vmatpush.msra.mxu0 %v196
    %222 = vmatpush.msra.mxu0 %v195
    %223 = vmatpush.msra.mxu0 %v194
    %224 = vmatpush.msra.mxu0 %v193
    %225 = vmatmul.f32.gmra.mxu0 %v198
    %v226 = vpop.f32.mrf.mxu0
    %v227 = vadd.f32 0.0, %v226
    %228 = vmatmul.f32.gmra.mxu0 %v201
    %v229 = vpop.f32.mrf.mxu0
    %v230 = vadd.f32 0.0, %v229
    %231 = vmatmul.f32.gmra.mxu0 %v204
    %v232 = vpop.f32.mrf.mxu0
    %v233 = vadd.f32 0.0, %v232
    %234 = vmatmul.f32.gmra.mxu0 %v207
    %v235 = vpop.f32.mrf.mxu0
    %v236 = vadd.f32 0.0, %v235
    %237 = vdwg.mxu0
    %v238 = vld [vmem:[#allocation2 + $0x2] sm:$0x1]
    %v239 = vperm.slane %v238, 0
    %v240 = vadd.f32 %v187, %v239
    %v241 = vadd.f32 %v190, %v239
    %v242 = vld [vmem:[#allocation2 + $0x3] sm:$0x1]
    %v243 = vperm.slane %v242, 0
    %245 = vrot.lane.b32.xlu0 %v243, 32
    %v246 = vpop.permute.xlu0 %245
    %v248 = vadd.f32 %v187, %v246
    %v249 = vadd.f32 %v190, %v246
    %v250 = vld [vmem:[#allocation2 + $0x4] sm:$0x1]
    %v251 = vperm.slane %v250, 0
    %253 = vrot.lane.b32.xlu0 %v251, 64
    %v254 = vpop.permute.xlu0 %253
    %v256 = vadd.f32 %v187, %v254
    %v257 = vadd.f32 %v190, %v254
    %v258 = vld [vmem:[#allocation2 + $0x5] sm:$0x1]
    %v259 = vperm.slane %v258, 0
    %v260 = vadd.f32 %v227, %v259
    %v261 = vadd.f32 %v230, %v259
    %v262 = vadd.f32 %v233, %v259
    %v263 = vadd.f32 %v236, %v259
    %v264 = vld [vmem:[#allocation2 + $0x6] sm:$0x1]
    %v265 = vperm.slane %v264, 0
    %267 = vrot.lane.b32.xlu0 %v265, 32
    %v268 = vpop.permute.xlu0 %267
    %v270 = vadd.f32 %v227, %v268
    %v271 = vadd.f32 %v230, %v268
    %v272 = vadd.f32 %v233, %v268
    %v273 = vadd.f32 %v236, %v268
    %v274 = vld [vmem:[#allocation2 + $0x7] sm:$0x1]
    %v275 = vperm.slane %v274, 0
    %277 = vrot.lane.b32.xlu0 %v275, 64
    %v278 = vpop.permute.xlu0 %277
    %v280 = vadd.f32 %v227, %v278
    %v281 = vadd.f32 %v230, %v278
    %v282 = vadd.f32 %v233, %v278
    %v283 = vadd.f32 %v236, %v278
    %v284 = vld [vmem:[#allocation5] sm:$0xff]
    %v285 = vld [vmem:[#allocation5 + $0x8] sm:$0xff]
    %v286 = vld [vmem:[#allocation5 + $0x10] sm:$0x3]
    %v287 = vld [vmem:[%s8] sm:$0xff]
    %v288 = vld [vmem:[%s8 + $0x8] sm:$0xff]
    %v289 = vld [vmem:[%s8 + $0x10] sm:$0xff]
    %v290 = vld [vmem:[%s8 + $0x18] sm:$0xff]
    %v291 = vld [vmem:[%s8 + $0x20] sm:$0x3]
    %v292 = vld [vmem:[%s5] sm:$0xff]
    %v293 = vld [vmem:[%s5 + $0x8] sm:$0xff]
    %v294 = vld [vmem:[%s5 + $0x10] sm:$0xff]
    %v295 = vld [vmem:[%s5 + $0x18] sm:$0xff]
    %v296 = vld [vmem:[#allocation2 + $0x8] sm:$0x1]
    %vm297 = vcmask 64512
    %v299 = vsel %vm297, %v240, 0
    %v302 = vsel %vm297, %v241, 0
    %v305 = vsel %vm297, %v260, 0
    %v308 = vsel %vm297, %v261, 0
    %v311 = vsel %vm297, %v262, 0
    %v314 = vsel %vm297, %v263, 0
    %316 = vmatpush.xpose.msra.mxu0 0.0
    %317 = vmatpush.xpose.msra.mxu0 0.0
    %318 = vmatpush.xpose.msra.mxu0 0.0
    %319 = vmatpush.xpose.msra.mxu0 0.0
    %320 = vmatpush.xpose.msra.mxu0 0.0
    %321 = vmatpush.xpose.msra.mxu0 0.0
    %322 = vmatpush.xpose.msra.mxu0 0.0
    %323 = vmatpush.xpose.msra.mxu0 0.0
    %324 = vmatpush.xpose.msra.mxu0 0.0
    %325 = vmatpush.xpose.msra.mxu0 0.0
    %326 = vmatpush.xpose.msra.mxu0 0.0
    %327 = vmatpush.xpose.msra.mxu0 0.0
    %328 = vmatpush.xpose.msra.mxu0 %v314
    %329 = vmatpush.xpose.msra.mxu0 %v311
    %330 = vmatpush.xpose.msra.mxu0 %v308
    %331 = vmatpush.xpose.msra.mxu0 %v305
    %332 = vmatmul.f32.gmra.mxu0 %v299
    %v333 = vpop.f32.mrf.mxu0
    %v334 = vadd.f32 %v284, %v333
    %335 = vmatmul.f32.gmra.mxu0 %v302
    %v336 = vpop.f32.mrf.mxu0
    %v337 = vadd.f32 %v285, %v336
    %338 = vdwg.mxu0
    %v339 = vsel %vm162, %v334, -inf
    %340 = vmax.xlane.f32.xlu0 %v339
    %v341 = vpop.xlane.xlu0 %340
    %v342 = vsel %vm162, %v337, -inf
    %343 = vmax.xlane.f32.xlu0 %v342
    %v344 = vpop.xlane.xlu0 %343
    %v345 = vsub.f32 %v334, %v341
    %v346 = vsub.f32 %v337, %v344
    %v347 = vmul.f32 %v345, 1.442695
    %v348 = vpow.pop %v347
    %v349 = vmul.f32 %v346, 1.442695
    %v350 = vpow.pop %v349
    %v351 = vsel %vm162, %v348, 0.0
    %352 = vadd.xlane.f32.xlu0 %v351
    %v353 = vpop.xlane.xlu0 %352
    %v354 = vsel %vm162, %v350, 0.0
    %355 = vadd.xlane.f32.xlu0 %v354
    %v356 = vpop.xlane.xlu0 %355
    %v357 = vrcp.pop %v353
    %v358 = vmul.f32 %v353, %v357
    %v359 = vsub.f32 1.0, %v358
    %v360 = vmul.f32 %v357, %v359
    %v361 = vadd.f32 %v357, %v360
    %vm362 = vweird.f32 %v353
    %vm363 = vweird.f32 %v357
    %vm364 = vmor %vm362, %vm363
    %v365 = vsel %vm364, %v357, %v361
    %v366 = vand.u32 2147483647, %v353
    %vm367 = vcmp.eq.f32.partialorder %v366, 8.507059e+37
    %v368 = vand.u32 %v353, 2147483648
    %v369 = vor.u32 1.1754944e-38, %v368
    %v370 = vsel %vm367, %v369, %v365
    %v371 = vrcp.pop %v356
    %v372 = vmul.f32 %v356, %v371
    %v373 = vsub.f32 1.0, %v372
    %v374 = vmul.f32 %v371, %v373
    %v375 = vadd.f32 %v371, %v374
    %vm376 = vweird.f32 %v356
    %vm377 = vweird.f32 %v371
    %vm378 = vmor %vm376, %vm377
    %v379 = vsel %vm378, %v371, %v375
    %v380 = vand.u32 2147483647, %v356
    %vm381 = vcmp.eq.f32.partialorder %v380, 8.507059e+37
    %v382 = vand.u32 %v356, 2147483648
    %v383 = vor.u32 1.1754944e-38, %v382
    %v384 = vsel %vm381, %v383, %v379
    %v385 = vmul.f32 %v348, %v370
    %v386 = vmul.f32 %v350, %v384
    %391 = vrot.lane.b32.xlu0 %v270, 96
    %v392 = vpop.permute.xlu0 %391
    %393 = vrot.lane.b32.xlu0 %v271, 96
    %v394 = vpop.permute.xlu0 %393
    %395 = vrot.lane.b32.xlu0 %v272, 96
    %v396 = vpop.permute.xlu0 %395
    %397 = vrot.lane.b32.xlu0 %v273, 96
    %v398 = vpop.permute.xlu0 %397
    %v404 = vsel %vm162, %v385, 0
    %v407 = vsel %vm162, %v386, 0
    %409 = vmatpush.msra.mxu0 0.0
    %410 = vmatpush.msra.mxu0 0.0
    %411 = vmatpush.msra.mxu0 0.0
    %412 = vmatpush.msra.mxu0 0.0
    %413 = vmatpush.msra.mxu0 0.0
    %414 = vmatpush.msra.mxu0 0.0
    %415 = vmatpush.msra.mxu0 0.0
    %416 = vmatpush.msra.mxu0 0.0
    %417 = vmatpush.msra.mxu0 0.0
    %418 = vmatpush.msra.mxu0 0.0
    %419 = vmatpush.msra.mxu0 0.0
    %420 = vmatpush.msra.mxu0 0.0
    %421 = vmatpush.msra.mxu0 %v398
    %422 = vmatpush.msra.mxu0 %v396
    %423 = vmatpush.msra.mxu0 %v394
    %424 = vmatpush.msra.mxu0 %v392
    %425 = vmatmul.f32.gmra.mxu0 %v404
    %v426 = vpop.f32.mrf.mxu0
    %v427 = vadd.f32 0.0, %v426
    %428 = vmatmul.f32.gmra.mxu0 %v407
    %v429 = vpop.f32.mrf.mxu0
    %v430 = vadd.f32 0.0, %v429
    %431 = vdwg.mxu0
    %432 = vrot.lane.b32.xlu0 %v240, 120
    %v433 = vpop.permute.xlu0 %432
    %434 = vrot.lane.b32.xlu0 %v241, 120
    %v435 = vpop.permute.xlu0 %434
    %436 = vrot.lane.b32.xlu0 %v260, 120
    %v437 = vpop.permute.xlu0 %436
    %438 = vrot.lane.b32.xlu0 %v261, 120
    %v439 = vpop.permute.xlu0 %438
    %440 = vrot.lane.b32.xlu0 %v262, 120
    %v441 = vpop.permute.xlu0 %440
    %442 = vrot.lane.b32.xlu0 %v263, 120
    %v443 = vpop.permute.xlu0 %442
    %v444 = vsel %vm297, %v433, 0
    %v446 = vsel %vm297, %v435, 0
    %v448 = vsel %vm297, %v437, 0
    %v450 = vsel %vm297, %v439, 0
    %v452 = vsel %vm297, %v441, 0
    %v454 = vsel %vm297, %v443, 0
    %456 = vmatpush.xpose.msra.mxu0 0.0
    %457 = vmatpush.xpose.msra.mxu0 0.0
    %458 = vmatpush.xpose.msra.mxu0 0.0
    %459 = vmatpush.xpose.msra.mxu0 0.0
    %460 = vmatpush.xpose.msra.mxu0 0.0
    %461 = vmatpush.xpose.msra.mxu0 0.0
    %462 = vmatpush.xpose.msra.mxu0 0.0
    %463 = vmatpush.xpose.msra.mxu0 0.0
    %464 = vmatpush.xpose.msra.mxu0 0.0
    %465 = vmatpush.xpose.msra.mxu0 0.0
    %466 = vmatpush.xpose.msra.mxu0 0.0
    %467 = vmatpush.xpose.msra.mxu0 0.0
    %468 = vmatpush.xpose.msra.mxu0 %v454
    %469 = vmatpush.xpose.msra.mxu0 %v452
    %470 = vmatpush.xpose.msra.mxu0 %v450
    %471 = vmatpush.xpose.msra.mxu0 %v448
    %472 = vmatmul.f32.gmra.mxu0 %v444
    %v473 = vpop.f32.mrf.mxu0
    %v474 = vadd.f32 %v284, %v473
    %475 = vmatmul.f32.gmra.mxu0 %v446
    %v476 = vpop.f32.mrf.mxu0
    %v477 = vadd.f32 %v285, %v476
    %478 = vdwg.mxu0
    %v479 = vsel %vm162, %v474, -inf
    %480 = vmax.xlane.f32.xlu0 %v479
    %v481 = vpop.xlane.xlu0 %480
    %v482 = vsel %vm162, %v477, -inf
    %483 = vmax.xlane.f32.xlu0 %v482
    %v484 = vpop.xlane.xlu0 %483
    %v485 = vsub.f32 %v474, %v481
    %v486 = vsub.f32 %v477, %v484
    %v487 = vmul.f32 %v485, 1.442695
    %v488 = vpow.pop %v487
    %v489 = vmul.f32 %v486, 1.442695
    %v490 = vpow.pop %v489
    %v491 = vsel %vm162, %v488, 0.0
    %492 = vadd.xlane.f32.xlu0 %v491
    %v493 = vpop.xlane.xlu0 %492
    %v494 = vsel %vm162, %v490, 0.0
    %495 = vadd.xlane.f32.xlu0 %v494
    %v496 = vpop.xlane.xlu0 %495
    %v497 = vrcp.pop %v493
    %v498 = vmul.f32 %v493, %v497
    %v499 = vsub.f32 1.0, %v498
    %v500 = vmul.f32 %v497, %v499
    %v501 = vadd.f32 %v497, %v500
    %vm502 = vweird.f32 %v493
    %vm503 = vweird.f32 %v497
    %vm504 = vmor %vm502, %vm503
    %v505 = vsel %vm504, %v497, %v501
    %v506 = vand.u32 2147483647, %v493
    %vm507 = vcmp.eq.f32.partialorder %v506, 8.507059e+37
    %v508 = vand.u32 %v493, 2147483648
    %v509 = vor.u32 1.1754944e-38, %v508
    %v510 = vsel %vm507, %v509, %v505
    %v511 = vrcp.pop %v496
    %v512 = vmul.f32 %v496, %v511
    %v513 = vsub.f32 1.0, %v512
    %v514 = vmul.f32 %v511, %v513
    %v515 = vadd.f32 %v511, %v514
    %vm516 = vweird.f32 %v496
    %vm517 = vweird.f32 %v511
    %vm518 = vmor %vm516, %vm517
    %v519 = vsel %vm518, %v511, %v515
    %v520 = vand.u32 2147483647, %v496
    %vm521 = vcmp.eq.f32.partialorder %v520, 8.507059e+37
    %v522 = vand.u32 %v496, 2147483648
    %v523 = vor.u32 1.1754944e-38, %v522
    %v524 = vsel %vm521, %v523, %v519
    %v525 = vmul.f32 %v488, %v510
    %v526 = vmul.f32 %v490, %v524
    %527 = vrot.lane.b32.xlu0 %v270, 88
    %v528 = vpop.permute.xlu0 %527
    %529 = vrot.lane.b32.xlu0 %v271, 88
    %v530 = vpop.permute.xlu0 %529
    %531 = vrot.lane.b32.xlu0 %v272, 88
    %v532 = vpop.permute.xlu0 %531
    %533 = vrot.lane.b32.xlu0 %v273, 88
    %v534 = vpop.permute.xlu0 %533
    %v540 = vsel %vm162, %v525, 0
    %v543 = vsel %vm162, %v526, 0
    %545 = vmatpush.msra.mxu0 0.0
    %546 = vmatpush.msra.mxu0 0.0
    %547 = vmatpush.msra.mxu0 0.0
    %548 = vmatpush.msra.mxu0 0.0
    %549 = vmatpush.msra.mxu0 0.0
    %550 = vmatpush.msra.mxu0 0.0
    %551 = vmatpush.msra.mxu0 0.0
    %552 = vmatpush.msra.mxu0 0.0
    %553 = vmatpush.msra.mxu0 0.0
    %554 = vmatpush.msra.mxu0 0.0
    %555 = vmatpush.msra.mxu0 0.0
    %556 = vmatpush.msra.mxu0 0.0
    %557 = vmatpush.msra.mxu0 %v534
    %558 = vmatpush.msra.mxu0 %v532
    %559 = vmatpush.msra.mxu0 %v530
    %560 = vmatpush.msra.mxu0 %v528
    %561 = vmatmul.f32.gmra.mxu0 %v540
    %v562 = vpop.f32.mrf.mxu0
    %v563 = vadd.f32 0.0, %v562
    %564 = vmatmul.f32.gmra.mxu0 %v543
    %v565 = vpop.f32.mrf.mxu0
    %v566 = vadd.f32 0.0, %v565
    %567 = vdwg.mxu0
    %568 = vrot.lane.b32.xlu0 %v240, 112
    %v569 = vpop.permute.xlu0 %568
    %570 = vrot.lane.b32.xlu0 %v241, 112
    %v571 = vpop.permute.xlu0 %570
    %572 = vrot.lane.b32.xlu0 %v260, 112
    %v573 = vpop.permute.xlu0 %572
    %574 = vrot.lane.b32.xlu0 %v261, 112
    %v575 = vpop.permute.xlu0 %574
    %576 = vrot.lane.b32.xlu0 %v262, 112
    %v577 = vpop.permute.xlu0 %576
    %578 = vrot.lane.b32.xlu0 %v263, 112
    %v579 = vpop.permute.xlu0 %578
    %v580 = vsel %vm297, %v569, 0
    %v582 = vsel %vm297, %v571, 0
    %v584 = vsel %vm297, %v573, 0
    %v586 = vsel %vm297, %v575, 0
    %v588 = vsel %vm297, %v577, 0
    %v590 = vsel %vm297, %v579, 0
    %592 = vmatpush.xpose.msra.mxu0 0.0
    %593 = vmatpush.xpose.msra.mxu0 0.0
    %594 = vmatpush.xpose.msra.mxu0 0.0
    %595 = vmatpush.xpose.msra.mxu0 0.0
    %596 = vmatpush.xpose.msra.mxu0 0.0
    %597 = vmatpush.xpose.msra.mxu0 0.0
    %598 = vmatpush.xpose.msra.mxu0 0.0
    %599 = vmatpush.xpose.msra.mxu0 0.0
    %600 = vmatpush.xpose.msra.mxu0 0.0
    %601 = vmatpush.xpose.msra.mxu0 0.0
    %602 = vmatpush.xpose.msra.mxu0 0.0
    %603 = vmatpush.xpose.msra.mxu0 0.0
    %604 = vmatpush.xpose.msra.mxu0 %v590
    %605 = vmatpush.xpose.msra.mxu0 %v588
    %606 = vmatpush.xpose.msra.mxu0 %v586
    %607 = vmatpush.xpose.msra.mxu0 %v584
    %608 = vmatmul.f32.gmra.mxu0 %v580
    %v609 = vpop.f32.mrf.mxu0
    %v610 = vadd.f32 %v284, %v609
    %611 = vmatmul.f32.gmra.mxu0 %v582
    %v612 = vpop.f32.mrf.mxu0
    %v613 = vadd.f32 %v285, %v612
    %614 = vdwg.mxu0
    %v615 = vsel %vm162, %v610, -inf
    %616 = vmax.xlane.f32.xlu0 %v615
    %v617 = vpop.xlane.xlu0 %616
    %v618 = vsel %vm162, %v613, -inf
    %619 = vmax.xlane.f32.xlu0 %v618
    %v620 = vpop.xlane.xlu0 %619
    %v621 = vsub.f32 %v610, %v617
    %v622 = vsub.f32 %v613, %v620
    %v623 = vmul.f32 %v621, 1.442695
    %v624 = vpow.pop %v623
    %v625 = vmul.f32 %v622, 1.442695
    %v626 = vpow.pop %v625
    %v627 = vsel %vm162, %v624, 0.0
    %628 = vadd.xlane.f32.xlu0 %v627
    %v629 = vpop.xlane.xlu0 %628
    %v630 = vsel %vm162, %v626, 0.0
    %631 = vadd.xlane.f32.xlu0 %v630
    %v632 = vpop.xlane.xlu0 %631
    %v633 = vrcp.pop %v629
    %v634 = vmul.f32 %v629, %v633
    %v635 = vsub.f32 1.0, %v634
    %v636 = vmul.f32 %v633, %v635
    %v637 = vadd.f32 %v633, %v636
    %vm638 = vweird.f32 %v629
    %vm639 = vweird.f32 %v633
    %vm640 = vmor %vm638, %vm639
    %v641 = vsel %vm640, %v633, %v637
    %v642 = vand.u32 2147483647, %v629
    %vm643 = vcmp.eq.f32.partialorder %v642, 8.507059e+37
    %v644 = vand.u32 %v629, 2147483648
    %v645 = vor.u32 1.1754944e-38, %v644
    %v646 = vsel %vm643, %v645, %v641
    %v647 = vrcp.pop %v632
    %v648 = vmul.f32 %v632, %v647
    %v649 = vsub.f32 1.0, %v648
    %v650 = vmul.f32 %v647, %v649
    %v651 = vadd.f32 %v647, %v650
    %vm652 = vweird.f32 %v632
    %vm653 = vweird.f32 %v647
    %vm654 = vmor %vm652, %vm653
    %v655 = vsel %vm654, %v647, %v651
    %v656 = vand.u32 2147483647, %v632
    %vm657 = vcmp.eq.f32.partialorder %v656, 8.507059e+37
    %v658 = vand.u32 %v632, 2147483648
    %v659 = vor.u32 1.1754944e-38, %v658
    %v660 = vsel %vm657, %v659, %v655
    %v661 = vmul.f32 %v624, %v646
    %v662 = vmul.f32 %v626, %v660
    %663 = vrot.lane.b32.xlu0 %v270, 80
    %v664 = vpop.permute.xlu0 %663
    %665 = vrot.lane.b32.xlu0 %v271, 80
    %v666 = vpop.permute.xlu0 %665
    %667 = vrot.lane.b32.xlu0 %v272, 80
    %v668 = vpop.permute.xlu0 %667
    %669 = vrot.lane.b32.xlu0 %v273, 80
    %v670 = vpop.permute.xlu0 %669
    %v676 = vsel %vm162, %v661, 0
    %v679 = vsel %vm162, %v662, 0
    %681 = vmatpush.msra.mxu0 0.0
    %682 = vmatpush.msra.mxu0 0.0
    %683 = vmatpush.msra.mxu0 0.0
    %684 = vmatpush.msra.mxu0 0.0
    %685 = vmatpush.msra.mxu0 0.0
    %686 = vmatpush.msra.mxu0 0.0
    %687 = vmatpush.msra.mxu0 0.0
    %688 = vmatpush.msra.mxu0 0.0
    %689 = vmatpush.msra.mxu0 0.0
    %690 = vmatpush.msra.mxu0 0.0
    %691 = vmatpush.msra.mxu0 0.0
    %692 = vmatpush.msra.mxu0 0.0
    %693 = vmatpush.msra.mxu0 %v670
    %694 = vmatpush.msra.mxu0 %v668
    %695 = vmatpush.msra.mxu0 %v666
    %696 = vmatpush.msra.mxu0 %v664
    %697 = vmatmul.f32.gmra.mxu0 %v676
    %v698 = vpop.f32.mrf.mxu0
    %v699 = vadd.f32 0.0, %v698
    %700 = vmatmul.f32.gmra.mxu0 %v679
    %v701 = vpop.f32.mrf.mxu0
    %v702 = vadd.f32 0.0, %v701
    %703 = vdwg.mxu0
    %704 = vrot.lane.b32.xlu0 %v240, 104
    %v705 = vpop.permute.xlu0 %704
    %706 = vrot.lane.b32.xlu0 %v241, 104
    %v707 = vpop.permute.xlu0 %706
    %708 = vrot.lane.b32.xlu0 %v260, 104
    %v709 = vpop.permute.xlu0 %708
    %710 = vrot.lane.b32.xlu0 %v261, 104
    %v711 = vpop.permute.xlu0 %710
    %712 = vrot.lane.b32.xlu0 %v262, 104
    %v713 = vpop.permute.xlu0 %712
    %714 = vrot.lane.b32.xlu0 %v263, 104
    %v715 = vpop.permute.xlu0 %714
    %v716 = vsel %vm297, %v705, 0
    %v718 = vsel %vm297, %v707, 0
    %v720 = vsel %vm297, %v709, 0
    %v722 = vsel %vm297, %v711, 0
    %v724 = vsel %vm297, %v713, 0
    %v726 = vsel %vm297, %v715, 0
    %728 = vmatpush.xpose.msra.mxu0 0.0
    %729 = vmatpush.xpose.msra.mxu0 0.0
    %730 = vmatpush.xpose.msra.mxu0 0.0
    %731 = vmatpush.xpose.msra.mxu0 0.0
    %732 = vmatpush.xpose.msra.mxu0 0.0
    %733 = vmatpush.xpose.msra.mxu0 0.0
    %734 = vmatpush.xpose.msra.mxu0 0.0
    %735 = vmatpush.xpose.msra.mxu0 0.0
    %736 = vmatpush.xpose.msra.mxu0 0.0
    %737 = vmatpush.xpose.msra.mxu0 0.0
    %738 = vmatpush.xpose.msra.mxu0 0.0
    %739 = vmatpush.xpose.msra.mxu0 0.0
    %740 = vmatpush.xpose.msra.mxu0 %v726
    %741 = vmatpush.xpose.msra.mxu0 %v724
    %742 = vmatpush.xpose.msra.mxu0 %v722
    %743 = vmatpush.xpose.msra.mxu0 %v720
    %744 = vmatmul.f32.gmra.mxu0 %v716
    %v745 = vpop.f32.mrf.mxu0
    %v746 = vadd.f32 %v284, %v745
    %747 = vmatmul.f32.gmra.mxu0 %v718
    %v748 = vpop.f32.mrf.mxu0
    %v749 = vadd.f32 %v285, %v748
    %750 = vdwg.mxu0
    %v751 = vsel %vm162, %v746, -inf
    %752 = vmax.xlane.f32.xlu0 %v751
    %v753 = vpop.xlane.xlu0 %752
    %v754 = vsel %vm162, %v749, -inf
    %755 = vmax.xlane.f32.xlu0 %v754
    %v756 = vpop.xlane.xlu0 %755
    %v757 = vsub.f32 %v746, %v753
    %v758 = vsub.f32 %v749, %v756
    %v759 = vmul.f32 %v757, 1.442695
    %v760 = vpow.pop %v759
    %v761 = vmul.f32 %v758, 1.442695
    %v762 = vpow.pop %v761
    %v763 = vsel %vm162, %v760, 0.0
    %764 = vadd.xlane.f32.xlu0 %v763
    %v765 = vpop.xlane.xlu0 %764
    %v766 = vsel %vm162, %v762, 0.0
    %767 = vadd.xlane.f32.xlu0 %v766
    %v768 = vpop.xlane.xlu0 %767
    %v769 = vrcp.pop %v765
    %v770 = vmul.f32 %v765, %v769
    %v771 = vsub.f32 1.0, %v770
    %v772 = vmul.f32 %v769, %v771
    %v773 = vadd.f32 %v769, %v772
    %vm774 = vweird.f32 %v765
    %vm775 = vweird.f32 %v769
    %vm776 = vmor %vm774, %vm775
    %v777 = vsel %vm776, %v769, %v773
    %v778 = vand.u32 2147483647, %v765
    %vm779 = vcmp.eq.f32.partialorder %v778, 8.507059e+37
    %v780 = vand.u32 %v765, 2147483648
    %v781 = vor.u32 1.1754944e-38, %v780
    %v782 = vsel %vm779, %v781, %v777
    %v783 = vrcp.pop %v768
    %v784 = vmul.f32 %v768, %v783
    %v785 = vsub.f32 1.0, %v784
    %v786 = vmul.f32 %v783, %v785
    %v787 = vadd.f32 %v783, %v786
    %vm788 = vweird.f32 %v768
    %vm789 = vweird.f32 %v783
    %vm790 = vmor %vm788, %vm789
    %v791 = vsel %vm790, %v783, %v787
    %v792 = vand.u32 2147483647, %v768
    %vm793 = vcmp.eq.f32.partialorder %v792, 8.507059e+37
    %v794 = vand.u32 %v768, 2147483648
    %v795 = vor.u32 1.1754944e-38, %v794
    %v796 = vsel %vm793, %v795, %v791
    %v797 = vmul.f32 %v760, %v782
    %v798 = vmul.f32 %v762, %v796
    %799 = vrot.lane.b32.xlu0 %v270, 72
    %v800 = vpop.permute.xlu0 %799
    %801 = vrot.lane.b32.xlu0 %v271, 72
    %v802 = vpop.permute.xlu0 %801
    %803 = vrot.lane.b32.xlu0 %v272, 72
    %v804 = vpop.permute.xlu0 %803
    %805 = vrot.lane.b32.xlu0 %v273, 72
    %v806 = vpop.permute.xlu0 %805
    %v812 = vsel %vm162, %v797, 0
    %v815 = vsel %vm162, %v798, 0
    %817 = vmatpush.msra.mxu0 0.0
    %818 = vmatpush.msra.mxu0 0.0
    %819 = vmatpush.msra.mxu0 0.0
    %820 = vmatpush.msra.mxu0 0.0
    %821 = vmatpush.msra.mxu0 0.0
    %822 = vmatpush.msra.mxu0 0.0
    %823 = vmatpush.msra.mxu0 0.0
    %824 = vmatpush.msra.mxu0 0.0
    %825 = vmatpush.msra.mxu0 0.0
    %826 = vmatpush.msra.mxu0 0.0
    %827 = vmatpush.msra.mxu0 0.0
    %828 = vmatpush.msra.mxu0 0.0
    %829 = vmatpush.msra.mxu0 %v806
    %830 = vmatpush.msra.mxu0 %v804
    %831 = vmatpush.msra.mxu0 %v802
    %832 = vmatpush.msra.mxu0 %v800
    %833 = vmatmul.f32.gmra.mxu0 %v812
    %v834 = vpop.f32.mrf.mxu0
    %v835 = vadd.f32 0.0, %v834
    %836 = vmatmul.f32.gmra.mxu0 %v815
    %v837 = vpop.f32.mrf.mxu0
    %v838 = vadd.f32 0.0, %v837
    %839 = vdwg.mxu0
    %842 = vrot.lane.b32.xlu0 %v563, 8
    %v843 = vpop.permute.xlu0 %842
    %844 = vrot.lane.b32.xlu0 %v566, 8
    %v845 = vpop.permute.xlu0 %844
    %850 = vrot.lane.b32.xlu0 %v699, 16
    %v851 = vpop.permute.xlu0 %850
    %852 = vrot.lane.b32.xlu0 %v702, 16
    %v853 = vpop.permute.xlu0 %852
    %858 = vrot.lane.b32.xlu0 %v835, 24
    %v859 = vpop.permute.xlu0 %858
    %860 = vrot.lane.b32.xlu0 %v838, 24
    %v861 = vpop.permute.xlu0 %860
    %v864 = vsel %vm297, %v427, %v843
    %v865 = vsel %vm297, %v430, %v845
    %vm866 = vcmask 130048
    %v867 = vsel %vm866, %v864, %v851
    %v868 = vsel %vm866, %v865, %v853
    %vm869 = vcmask 195584
    %v870 = vsel %vm869, %v867, %v859
    %v871 = vsel %vm869, %v868, %v861
    %v872 = vperm.slane %v296, 0
    %v874 = vsel %vm162, %v870, 0
    %v877 = vsel %vm162, %v871, 0
    %879 = vmatpush.msra.mxu0 0.0
    %880 = vmatpush.msra.mxu0 0.0
    %881 = vmatpush.msra.mxu0 0.0
    %882 = vmatpush.msra.mxu0 0.0
    %883 = vmatpush.msra.mxu0 0.0
    %884 = vmatpush.msra.mxu0 0.0
    %885 = vmatpush.msra.mxu0 0.0
    %886 = vmatpush.msra.mxu0 0.0
    %887 = vmatpush.msra.mxu0 0.0
    %888 = vmatpush.msra.mxu0 0.0
    %889 = vmatpush.msra.mxu0 0.0
    %890 = vmatpush.msra.mxu0 0.0
    %891 = vmatpush.msra.mxu0 %v295
    %892 = vmatpush.msra.mxu0 %v294
    %893 = vmatpush.msra.mxu0 %v293
    %894 = vmatpush.msra.mxu0 %v292
    %895 = vmatmul.f32.gmra.mxu0 %v874
    %v896 = vpop.f32.mrf.mxu0
    %v897 = vadd.f32 %v872, %v896
    %898 = vmatmul.f32.gmra.mxu0 %v877
    %v899 = vpop.f32.mrf.mxu0
    %v900 = vadd.f32 %v872, %v899
    %901 = vdwg.mxu0
    %v902 = vadd.f32 %v104, %v897
    %v903 = vadd.f32 %v107, %v900
    %v904 = vld [vmem:[#allocation2 + $0xa] sm:$0x1]
    %v905 = vld [vmem:[#allocation2 + $0xb] sm:$0x1]
    %v906 = vsel %vm162, %v902, 0.0
    %907 = vadd.xlane.f32.xlu0 %v906
    %v908 = vpop.xlane.xlu0 %907
    %v909 = vsel %vm162, %v903, 0.0
    %910 = vadd.xlane.f32.xlu0 %v909
    %v911 = vpop.xlane.xlu0 %910
    %v912 = vrcp.pop 32.0
    %v913 = vmul.f32 32.0, %v912
    %v914 = vsub.f32 1.0, %v913
    %v915 = vmul.f32 %v912, %v914
    %v916 = vadd.f32 %v912, %v915
    %vm917 = vweird.f32 %v912
    %v918 = vsel %vm917, %v912, %v916
    %v919 = vmul.f32 %v908, %v918
    %v920 = vmul.f32 %v911, %v918
    %v921 = vsub.f32 %v902, %v919
    %v922 = vsub.f32 %v903, %v920
    %v923 = vmul.f32 %v921, %v921
    %v924 = vmul.f32 %v922, %v922
    %v925 = vsel %vm162, %v923, 0.0
    %926 = vadd.xlane.f32.xlu0 %v925
    %v927 = vpop.xlane.xlu0 %926
    %v928 = vsel %vm162, %v924, 0.0
    %929 = vadd.xlane.f32.xlu0 %v928
    %v930 = vpop.xlane.xlu0 %929
    %v931 = vmul.f32 %v927, %v918
    %v932 = vmul.f32 %v930, %v918
    %v933 = vadd.f32 %v931, 1e-05
    %v934 = vadd.f32 %v932, 1e-05
    %v935 = vrsqrt.pop %v933
    %v936 = vmul.f32 %v935, %v933
    %v937 = vmul.f32 %v936, %v935
    %v938 = vmul.f32 0.5, %v937
    %v939 = vsub.f32 1.5, %v938
    %v940 = vmul.f32 %v935, %v939
    %vm941 = vweird.f32 %v933
    %vm942 = vweird.f32 %v935
    %vm943 = vmor %vm941, %vm942
    %v944 = vsel %vm943, %v935, %v940
    %v945 = vrsqrt.pop %v934
    %v946 = vmul.f32 %v945, %v934
    %v947 = vmul.f32 %v946, %v945
    %v948 = vmul.f32 0.5, %v947
    %v949 = vsub.f32 1.5, %v948
    %v950 = vmul.f32 %v945, %v949
    %vm951 = vweird.f32 %v934
    %vm952 = vweird.f32 %v945
    %vm953 = vmor %vm951, %vm952
    %v954 = vsel %vm953, %v945, %v950
    %v955 = vmul.f32 %v921, %v944
    %v956 = vmul.f32 %v922, %v954
    %v957 = vperm.slane %v904, 0
    %v958 = vmul.f32 %v955, %v957
    %v959 = vmul.f32 %v956, %v957
    %v960 = vperm.slane %v905, 0
    %v961 = vadd.f32 %v958, %v960
    %v962 = vadd.f32 %v959, %v960
    %s963 = scalar_lea.vmem %s5, 32
    %v964 = vld [vmem:[%s963] sm:$0xff]
    %v965 = vld [vmem:[%s963 + $0x8] sm:$0xff]
    %v966 = vld [vmem:[%s963 + $0x10] sm:$0xff]
    %v967 = vld [vmem:[%s963 + $0x18] sm:$0xff]
    %v968 = vld [vmem:[#allocation2 + $0x9] sm:$0x1]
    %973 = vrot.lane.b32.xlu0 %v280, 64
    %v974 = vpop.permute.xlu0 %973
    %975 = vrot.lane.b32.xlu0 %v281, 64
    %v976 = vpop.permute.xlu0 %975
    %977 = vrot.lane.b32.xlu0 %v282, 64
    %v978 = vpop.permute.xlu0 %977
    %979 = vrot.lane.b32.xlu0 %v283, 64
    %v980 = vpop.permute.xlu0 %979
    %983 = vrot.lane.b32.xlu0 %v248, 96
    %v984 = vpop.permute.xlu0 %983
    %985 = vrot.lane.b32.xlu0 %v249, 96
    %v986 = vpop.permute.xlu0 %985
    %v987 = vsel %vm297, %v974, 0
    %v989 = vsel %vm297, %v976, 0
    %v991 = vsel %vm297, %v978, 0
    %v993 = vsel %vm297, %v980, 0
    %v995 = vsel %vm297, %v984, 0
    %v997 = vsel %vm297, %v986, 0
    %999 = vmatpush.xpose.msra.mxu0 0.0
    %1000 = vmatpush.xpose.msra.mxu0 0.0
    %1001 = vmatpush.xpose.msra.mxu0 0.0
    %1002 = vmatpush.xpose.msra.mxu0 0.0
    %1003 = vmatpush.xpose.msra.mxu0 0.0
    %1004 = vmatpush.xpose.msra.mxu0 0.0
    %1005 = vmatpush.xpose.msra.mxu0 0.0
    %1006 = vmatpush.xpose.msra.mxu0 0.0
    %1007 = vmatpush.xpose.msra.mxu0 0.0
    %1008 = vmatpush.xpose.msra.mxu0 0.0
    %1009 = vmatpush.xpose.msra.mxu0 0.0
    %1010 = vmatpush.xpose.msra.mxu0 0.0
    %1011 = vmatpush.xpose.msra.mxu0 0.0
    %1012 = vmatpush.xpose.msra.mxu0 0.0
    %1013 = vmatpush.xpose.msra.mxu0 %v997
    %1014 = vmatpush.xpose.msra.mxu0 %v995
    %1015 = vmatmul.f32.gmra.mxu0 %v987
    %v1016 = vpop.f32.mrf.mxu0
    %v1017 = vadd.f32 %v287, %v1016
    %1018 = vmatmul.f32.gmra.mxu0 %v989
    %v1019 = vpop.f32.mrf.mxu0
    %v1020 = vadd.f32 %v288, %v1019
    %1021 = vmatmul.f32.gmra.mxu0 %v991
    %v1022 = vpop.f32.mrf.mxu0
    %v1023 = vadd.f32 %v289, %v1022
    %1024 = vmatmul.f32.gmra.mxu0 %v993
    %v1025 = vpop.f32.mrf.mxu0
    %v1026 = vadd.f32 %v290, %v1025
    %1027 = vdwg.mxu0
    %v1028 = vsel %vm866, %v1017, -inf
    %1029 = vmax.xlane.f32.xlu0 %v1028
    %v1030 = vpop.xlane.xlu0 %1029
    %v1031 = vsel %vm866, %v1020, -inf
    %1032 = vmax.xlane.f32.xlu0 %v1031
    %v1033 = vpop.xlane.xlu0 %1032
    %v1034 = vsel %vm866, %v1023, -inf
    %1035 = vmax.xlane.f32.xlu0 %v1034
    %v1036 = vpop.xlane.xlu0 %1035
    %v1037 = vsel %vm866, %v1026, -inf
    %1038 = vmax.xlane.f32.xlu0 %v1037
    %v1039 = vpop.xlane.xlu0 %1038
    %v1040 = vsub.f32 %v1017, %v1030
    %v1041 = vsub.f32 %v1020, %v1033
    %v1042 = vsub.f32 %v1023, %v1036
    %v1043 = vsub.f32 %v1026, %v1039
    %v1044 = vmul.f32 %v1040, 1.442695
    %v1045 = vpow.pop %v1044
    %v1046 = vmul.f32 %v1041, 1.442695
    %v1047 = vpow.pop %v1046
    %v1048 = vmul.f32 %v1042, 1.442695
    %v1049 = vpow.pop %v1048
    %v1050 = vmul.f32 %v1043, 1.442695
    %v1051 = vpow.pop %v1050
    %v1052 = vsel %vm866, %v1045, 0.0
    %1053 = vadd.xlane.f32.xlu0 %v1052
    %v1054 = vpop.xlane.xlu0 %1053
    %v1055 = vsel %vm866, %v1047, 0.0
    %1056 = vadd.xlane.f32.xlu0 %v1055
    %v1057 = vpop.xlane.xlu0 %1056
    %v1058 = vsel %vm866, %v1049, 0.0
    %1059 = vadd.xlane.f32.xlu0 %v1058
    %v1060 = vpop.xlane.xlu0 %1059
    %v1061 = vsel %vm866, %v1051, 0.0
    %1062 = vadd.xlane.f32.xlu0 %v1061
    %v1063 = vpop.xlane.xlu0 %1062
    %v1064 = vrcp.pop %v1054
    %v1065 = vmul.f32 %v1054, %v1064
    %v1066 = vsub.f32 1.0, %v1065
    %v1067 = vmul.f32 %v1064, %v1066
    %v1068 = vadd.f32 %v1064, %v1067
    %vm1069 = vweird.f32 %v1054
    %vm1070 = vweird.f32 %v1064
    %vm1071 = vmor %vm1069, %vm1070
    %v1072 = vsel %vm1071, %v1064, %v1068
    %v1073 = vand.u32 2147483647, %v1054
    %vm1074 = vcmp.eq.f32.partialorder %v1073, 8.507059e+37
    %v1075 = vand.u32 %v1054, 2147483648
    %v1076 = vor.u32 1.1754944e-38, %v1075
    %v1077 = vsel %vm1074, %v1076, %v1072
    %v1078 = vrcp.pop %v1057
    %v1079 = vmul.f32 %v1057, %v1078
    %v1080 = vsub.f32 1.0, %v1079
    %v1081 = vmul.f32 %v1078, %v1080
    %v1082 = vadd.f32 %v1078, %v1081
    %vm1083 = vweird.f32 %v1057
    %vm1084 = vweird.f32 %v1078
    %vm1085 = vmor %vm1083, %vm1084
    %v1086 = vsel %vm1085, %v1078, %v1082
    %v1087 = vand.u32 2147483647, %v1057
    %vm1088 = vcmp.eq.f32.partialorder %v1087, 8.507059e+37
    %v1089 = vand.u32 %v1057, 2147483648
    %v1090 = vor.u32 1.1754944e-38, %v1089
    %v1091 = vsel %vm1088, %v1090, %v1086
    %v1092 = vrcp.pop %v1060
    %v1093 = vmul.f32 %v1060, %v1092
    %v1094 = vsub.f32 1.0, %v1093
    %v1095 = vmul.f32 %v1092, %v1094
    %v1096 = vadd.f32 %v1092, %v1095
    %vm1097 = vweird.f32 %v1060
    %vm1098 = vweird.f32 %v1092
    %vm1099 = vmor %vm1097, %vm1098
    %v1100 = vsel %vm1099, %v1092, %v1096
    %v1101 = vand.u32 2147483647, %v1060
    %vm1102 = vcmp.eq.f32.partialorder %v1101, 8.507059e+37
    %v1103 = vand.u32 %v1060, 2147483648
    %v1104 = vor.u32 1.1754944e-38, %v1103
    %v1105 = vsel %vm1102, %v1104, %v1100
    %v1106 = vrcp.pop %v1063
    %v1107 = vmul.f32 %v1063, %v1106
    %v1108 = vsub.f32 1.0, %v1107
    %v1109 = vmul.f32 %v1106, %v1108
    %v1110 = vadd.f32 %v1106, %v1109
    %vm1111 = vweird.f32 %v1063
    %vm1112 = vweird.f32 %v1106
    %vm1113 = vmor %vm1111, %vm1112
    %v1114 = vsel %vm1113, %v1106, %v1110
    %v1115 = vand.u32 2147483647, %v1063
    %vm1116 = vcmp.eq.f32.partialorder %v1115, 8.507059e+37
    %v1117 = vand.u32 %v1063, 2147483648
    %v1118 = vor.u32 1.1754944e-38, %v1117
    %v1119 = vsel %vm1116, %v1118, %v1114
    %v1120 = vmul.f32 %v1045, %v1077
    %v1121 = vmul.f32 %v1047, %v1091
    %v1122 = vmul.f32 %v1049, %v1105
    %v1123 = vmul.f32 %v1051, %v1119
    %1126 = vrot.lane.b32.xlu0 %v256, 64
    %v1127 = vpop.permute.xlu0 %1126
    %1128 = vrot.lane.b32.xlu0 %v257, 64
    %v1129 = vpop.permute.xlu0 %1128
    %v1133 = vsel %vm866, %v1120, 0
    %v1136 = vsel %vm866, %v1121, 0
    %v1139 = vsel %vm866, %v1122, 0
    %v1142 = vsel %vm866, %v1123, 0
    %1144 = vmatpush.msra.mxu0 0.0
    %1145 = vmatpush.msra.mxu0 0.0
    %1146 = vmatpush.msra.mxu0 0.0
    %1147 = vmatpush.msra.mxu0 0.0
    %1148 = vmatpush.msra.mxu0 0.0
    %1149 = vmatpush.msra.mxu0 0.0
    %1150 = vmatpush.msra.mxu0 0.0
    %1151 = vmatpush.msra.mxu0 0.0
    %1152 = vmatpush.msra.mxu0 0.0
    %1153 = vmatpush.msra.mxu0 0.0
    %1154 = vmatpush.msra.mxu0 0.0
    %1155 = vmatpush.msra.mxu0 0.0
    %1156 = vmatpush.msra.mxu0 0.0
    %1157 = vmatpush.msra.mxu0 0.0
    %1158 = vmatpush.msra.mxu0 %v1129
    %1159 = vmatpush.msra.mxu0 %v1127
    %1160 = vmatmul.f32.gmra.mxu0 %v1133
    %v1161 = vpop.f32.mrf.mxu0
    %v1162 = vadd.f32 0.0, %v1161
    %1163 = vmatmul.f32.gmra.mxu0 %v1136
    %v1164 = vpop.f32.mrf.mxu0
    %v1165 = vadd.f32 0.0, %v1164
    %1166 = vmatmul.f32.gmra.mxu0 %v1139
    %v1167 = vpop.f32.mrf.mxu0
    %v1168 = vadd.f32 0.0, %v1167
    %1169 = vmatmul.f32.gmra.mxu0 %v1142
    %v1170 = vpop.f32.mrf.mxu0
    %v1171 = vadd.f32 0.0, %v1170
    %1172 = vdwg.mxu0
    %1173 = vrot.lane.b32.xlu0 %v280, 56
    %v1174 = vpop.permute.xlu0 %1173
    %1175 = vrot.lane.b32.xlu0 %v281, 56
    %v1176 = vpop.permute.xlu0 %1175
    %1177 = vrot.lane.b32.xlu0 %v282, 56
    %v1178 = vpop.permute.xlu0 %1177
    %1179 = vrot.lane.b32.xlu0 %v283, 56
    %v1180 = vpop.permute.xlu0 %1179
    %1181 = vrot.lane.b32.xlu0 %v248, 88
    %v1182 = vpop.permute.xlu0 %1181
    %1183 = vrot.lane.b32.xlu0 %v249, 88
    %v1184 = vpop.permute.xlu0 %1183
    %v1185 = vsel %vm297, %v1174, 0
    %v1187 = vsel %vm297, %v1176, 0
    %v1189 = vsel %vm297, %v1178, 0
    %v1191 = vsel %vm297, %v1180, 0
    %v1193 = vsel %vm297, %v1182, 0
    %v1195 = vsel %vm297, %v1184, 0
    %1197 = vmatpush.xpose.msra.mxu0 0.0
    %1198 = vmatpush.xpose.msra.mxu0 0.0
    %1199 = vmatpush.xpose.msra.mxu0 0.0
    %1200 = vmatpush.xpose.msra.mxu0 0.0
    %1201 = vmatpush.xpose.msra.mxu0 0.0
    %1202 = vmatpush.xpose.msra.mxu0 0.0
    %1203 = vmatpush.xpose.msra.mxu0 0.0
    %1204 = vmatpush.xpose.msra.mxu0 0.0
    %1205 = vmatpush.xpose.msra.mxu0 0.0
    %1206 = vmatpush.xpose.msra.mxu0 0.0
    %1207 = vmatpush.xpose.msra.mxu0 0.0
    %1208 = vmatpush.xpose.msra.mxu0 0.0
    %1209 = vmatpush.xpose.msra.mxu0 0.0
    %1210 = vmatpush.xpose.msra.mxu0 0.0
    %1211 = vmatpush.xpose.msra.mxu0 %v1195
    %1212 = vmatpush.xpose.msra.mxu0 %v1193
    %1213 = vmatmul.f32.gmra.mxu0 %v1185
    %v1214 = vpop.f32.mrf.mxu0
    %v1215 = vadd.f32 %v287, %v1214
    %1216 = vmatmul.f32.gmra.mxu0 %v1187
    %v1217 = vpop.f32.mrf.mxu0
    %v1218 = vadd.f32 %v288, %v1217
    %1219 = vmatmul.f32.gmra.mxu0 %v1189
    %v1220 = vpop.f32.mrf.mxu0
    %v1221 = vadd.f32 %v289, %v1220
    %1222 = vmatmul.f32.gmra.mxu0 %v1191
    %v1223 = vpop.f32.mrf.mxu0
    %v1224 = vadd.f32 %v290, %v1223
    %1225 = vdwg.mxu0
    %v1226 = vsel %vm866, %v1215, -inf
    %1227 = vmax.xlane.f32.xlu0 %v1226
    %v1228 = vpop.xlane.xlu0 %1227
    %v1229 = vsel %vm866, %v1218, -inf
    %1230 = vmax.xlane.f32.xlu0 %v1229
    %v1231 = vpop.xlane.xlu0 %1230
    %v1232 = vsel %vm866, %v1221, -inf
    %1233 = vmax.xlane.f32.xlu0 %v1232
    %v1234 = vpop.xlane.xlu0 %1233
    %v1235 = vsel %vm866, %v1224, -inf
    %1236 = vmax.xlane.f32.xlu0 %v1235
    %v1237 = vpop.xlane.xlu0 %1236
    %v1238 = vsub.f32 %v1215, %v1228
    %v1239 = vsub.f32 %v1218, %v1231
    %v1240 = vsub.f32 %v1221, %v1234
    %v1241 = vsub.f32 %v1224, %v1237
    %v1242 = vmul.f32 %v1238, 1.442695
    %v1243 = vpow.pop %v1242
    %v1244 = vmul.f32 %v1239, 1.442695
    %v1245 = vpow.pop %v1244
    %v1246 = vmul.f32 %v1240, 1.442695
    %v1247 = vpow.pop %v1246
    %v1248 = vmul.f32 %v1241, 1.442695
    %v1249 = vpow.pop %v1248
    %v1250 = vsel %vm866, %v1243, 0.0
    %1251 = vadd.xlane.f32.xlu0 %v1250
    %v1252 = vpop.xlane.xlu0 %1251
    %v1253 = vsel %vm866, %v1245, 0.0
    %1254 = vadd.xlane.f32.xlu0 %v1253
    %v1255 = vpop.xlane.xlu0 %1254
    %v1256 = vsel %vm866, %v1247, 0.0
    %1257 = vadd.xlane.f32.xlu0 %v1256
    %v1258 = vpop.xlane.xlu0 %1257
    %v1259 = vsel %vm866, %v1249, 0.0
    %1260 = vadd.xlane.f32.xlu0 %v1259
    %v1261 = vpop.xlane.xlu0 %1260
    %v1262 = vrcp.pop %v1252
    %v1263 = vmul.f32 %v1252, %v1262
    %v1264 = vsub.f32 1.0, %v1263
    %v1265 = vmul.f32 %v1262, %v1264
    %v1266 = vadd.f32 %v1262, %v1265
    %vm1267 = vweird.f32 %v1252
    %vm1268 = vweird.f32 %v1262
    %vm1269 = vmor %vm1267, %vm1268
    %v1270 = vsel %vm1269, %v1262, %v1266
    %v1271 = vand.u32 2147483647, %v1252
    %vm1272 = vcmp.eq.f32.partialorder %v1271, 8.507059e+37
    %v1273 = vand.u32 %v1252, 2147483648
    %v1274 = vor.u32 1.1754944e-38, %v1273
    %v1275 = vsel %vm1272, %v1274, %v1270
    %v1276 = vrcp.pop %v1255
    %v1277 = vmul.f32 %v1255, %v1276
    %v1278 = vsub.f32 1.0, %v1277
    %v1279 = vmul.f32 %v1276, %v1278
    %v1280 = vadd.f32 %v1276, %v1279
    %vm1281 = vweird.f32 %v1255
    %vm1282 = vweird.f32 %v1276
    %vm1283 = vmor %vm1281, %vm1282
    %v1284 = vsel %vm1283, %v1276, %v1280
    %v1285 = vand.u32 2147483647, %v1255
    %vm1286 = vcmp.eq.f32.partialorder %v1285, 8.507059e+37
    %v1287 = vand.u32 %v1255, 2147483648
    %v1288 = vor.u32 1.1754944e-38, %v1287
    %v1289 = vsel %vm1286, %v1288, %v1284
    %v1290 = vrcp.pop %v1258
    %v1291 = vmul.f32 %v1258, %v1290
    %v1292 = vsub.f32 1.0, %v1291
    %v1293 = vmul.f32 %v1290, %v1292
    %v1294 = vadd.f32 %v1290, %v1293
    %vm1295 = vweird.f32 %v1258
    %vm1296 = vweird.f32 %v1290
    %vm1297 = vmor %vm1295, %vm1296
    %v1298 = vsel %vm1297, %v1290, %v1294
    %v1299 = vand.u32 2147483647, %v1258
    %vm1300 = vcmp.eq.f32.partialorder %v1299, 8.507059e+37
    %v1301 = vand.u32 %v1258, 2147483648
    %v1302 = vor.u32 1.1754944e-38, %v1301
    %v1303 = vsel %vm1300, %v1302, %v1298
    %v1304 = vrcp.pop %v1261
    %v1305 = vmul.f32 %v1261, %v1304
    %v1306 = vsub.f32 1.0, %v1305
    %v1307 = vmul.f32 %v1304, %v1306
    %v1308 = vadd.f32 %v1304, %v1307
    %vm1309 = vweird.f32 %v1261
    %vm1310 = vweird.f32 %v1304
    %vm1311 = vmor %vm1309, %vm1310
    %v1312 = vsel %vm1311, %v1304, %v1308
    %v1313 = vand.u32 2147483647, %v1261
    %vm1314 = vcmp.eq.f32.partialorder %v1313, 8.507059e+37
    %v1315 = vand.u32 %v1261, 2147483648
    %v1316 = vor.u32 1.1754944e-38, %v1315
    %v1317 = vsel %vm1314, %v1316, %v1312
    %v1318 = vmul.f32 %v1243, %v1275
    %v1319 = vmul.f32 %v1245, %v1289
    %v1320 = vmul.f32 %v1247, %v1303
    %v1321 = vmul.f32 %v1249, %v1317
    %1322 = vrot.lane.b32.xlu0 %v256, 56
    %v1323 = vpop.permute.xlu0 %1322
    %1324 = vrot.lane.b32.xlu0 %v257, 56
    %v1325 = vpop.permute.xlu0 %1324
    %v1329 = vsel %vm866, %v1318, 0
    %v1332 = vsel %vm866, %v1319, 0
    %v1335 = vsel %vm866, %v1320, 0
    %v1338 = vsel %vm866, %v1321, 0
    %1340 = vmatpush.msra.mxu0 0.0
    %1341 = vmatpush.msra.mxu0 0.0
    %1342 = vmatpush.msra.mxu0 0.0
    %1343 = vmatpush.msra.mxu0 0.0
    %1344 = vmatpush.msra.mxu0 0.0
    %1345 = vmatpush.msra.mxu0 0.0
    %1346 = vmatpush.msra.mxu0 0.0
    %1347 = vmatpush.msra.mxu0 0.0
    %1348 = vmatpush.msra.mxu0 0.0
    %1349 = vmatpush.msra.mxu0 0.0
    %1350 = vmatpush.msra.mxu0 0.0
    %1351 = vmatpush.msra.mxu0 0.0
    %1352 = vmatpush.msra.mxu0 0.0
    %1353 = vmatpush.msra.mxu0 0.0
    %1354 = vmatpush.msra.mxu0 %v1325
    %1355 = vmatpush.msra.mxu0 %v1323
    %1356 = vmatmul.f32.gmra.mxu0 %v1329
    %v1357 = vpop.f32.mrf.mxu0
    %v1358 = vadd.f32 0.0, %v1357
    %1359 = vmatmul.f32.gmra.mxu0 %v1332
    %v1360 = vpop.f32.mrf.mxu0
    %v1361 = vadd.f32 0.0, %v1360
    %1362 = vmatmul.f32.gmra.mxu0 %v1335
    %v1363 = vpop.f32.mrf.mxu0
    %v1364 = vadd.f32 0.0, %v1363
    %1365 = vmatmul.f32.gmra.mxu0 %v1338
    %v1366 = vpop.f32.mrf.mxu0
    %v1367 = vadd.f32 0.0, %v1366
    %1368 = vdwg.mxu0
    %1369 = vrot.lane.b32.xlu0 %v280, 48
    %v1370 = vpop.permute.xlu0 %1369
    %1371 = vrot.lane.b32.xlu0 %v281, 48
    %v1372 = vpop.permute.xlu0 %1371
    %1373 = vrot.lane.b32.xlu0 %v282, 48
    %v1374 = vpop.permute.xlu0 %1373
    %1375 = vrot.lane.b32.xlu0 %v283, 48
    %v1376 = vpop.permute.xlu0 %1375
    %1377 = vrot.lane.b32.xlu0 %v248, 80
    %v1378 = vpop.permute.xlu0 %1377
    %1379 = vrot.lane.b32.xlu0 %v249, 80
    %v1380 = vpop.permute.xlu0 %1379
    %v1381 = vsel %vm297, %v1370, 0
    %v1383 = vsel %vm297, %v1372, 0
    %v1385 = vsel %vm297, %v1374, 0
    %v1387 = vsel %vm297, %v1376, 0
    %v1389 = vsel %vm297, %v1378, 0
    %v1391 = vsel %vm297, %v1380, 0
    %1393 = vmatpush.xpose.msra.mxu0 0.0
    %1394 = vmatpush.xpose.msra.mxu0 0.0
    %1395 = vmatpush.xpose.msra.mxu0 0.0
    %1396 = vmatpush.xpose.msra.mxu0 0.0
    %1397 = vmatpush.xpose.msra.mxu0 0.0
    %1398 = vmatpush.xpose.msra.mxu0 0.0
    %1399 = vmatpush.xpose.msra.mxu0 0.0
    %1400 = vmatpush.xpose.msra.mxu0 0.0
    %1401 = vmatpush.xpose.msra.mxu0 0.0
    %1402 = vmatpush.xpose.msra.mxu0 0.0
    %1403 = vmatpush.xpose.msra.mxu0 0.0
    %1404 = vmatpush.xpose.msra.mxu0 0.0
    %1405 = vmatpush.xpose.msra.mxu0 0.0
    %1406 = vmatpush.xpose.msra.mxu0 0.0
    %1407 = vmatpush.xpose.msra.mxu0 %v1391
    %1408 = vmatpush.xpose.msra.mxu0 %v1389
    %1409 = vmatmul.f32.gmra.mxu0 %v1381
    %v1410 = vpop.f32.mrf.mxu0
    %v1411 = vadd.f32 %v287, %v1410
    %1412 = vmatmul.f32.gmra.mxu0 %v1383
    %v1413 = vpop.f32.mrf.mxu0
    %v1414 = vadd.f32 %v288, %v1413
    %1415 = vmatmul.f32.gmra.mxu0 %v1385
    %v1416 = vpop.f32.mrf.mxu0
    %v1417 = vadd.f32 %v289, %v1416
    %1418 = vmatmul.f32.gmra.mxu0 %v1387
    %v1419 = vpop.f32.mrf.mxu0
    %v1420 = vadd.f32 %v290, %v1419
    %1421 = vdwg.mxu0
    %v1422 = vsel %vm866, %v1411, -inf
    %1423 = vmax.xlane.f32.xlu0 %v1422
    %v1424 = vpop.xlane.xlu0 %1423
    %v1425 = vsel %vm866, %v1414, -inf
    %1426 = vmax.xlane.f32.xlu0 %v1425
    %v1427 = vpop.xlane.xlu0 %1426
    %v1428 = vsel %vm866, %v1417, -inf
    %1429 = vmax.xlane.f32.xlu0 %v1428
    %v1430 = vpop.xlane.xlu0 %1429
    %v1431 = vsel %vm866, %v1420, -inf
    %1432 = vmax.xlane.f32.xlu0 %v1431
    %v1433 = vpop.xlane.xlu0 %1432
    %v1434 = vsub.f32 %v1411, %v1424
    %v1435 = vsub.f32 %v1414, %v1427
    %v1436 = vsub.f32 %v1417, %v1430
    %v1437 = vsub.f32 %v1420, %v1433
    %v1438 = vmul.f32 %v1434, 1.442695
    %v1439 = vpow.pop %v1438
    %v1440 = vmul.f32 %v1435, 1.442695
    %v1441 = vpow.pop %v1440
    %v1442 = vmul.f32 %v1436, 1.442695
    %v1443 = vpow.pop %v1442
    %v1444 = vmul.f32 %v1437, 1.442695
    %v1445 = vpow.pop %v1444
    %v1446 = vsel %vm866, %v1439, 0.0
    %1447 = vadd.xlane.f32.xlu0 %v1446
    %v1448 = vpop.xlane.xlu0 %1447
    %v1449 = vsel %vm866, %v1441, 0.0
    %1450 = vadd.xlane.f32.xlu0 %v1449
    %v1451 = vpop.xlane.xlu0 %1450
    %v1452 = vsel %vm866, %v1443, 0.0
    %1453 = vadd.xlane.f32.xlu0 %v1452
    %v1454 = vpop.xlane.xlu0 %1453
    %v1455 = vsel %vm866, %v1445, 0.0
    %1456 = vadd.xlane.f32.xlu0 %v1455
    %v1457 = vpop.xlane.xlu0 %1456
    %v1458 = vrcp.pop %v1448
    %v1459 = vmul.f32 %v1448, %v1458
    %v1460 = vsub.f32 1.0, %v1459
    %v1461 = vmul.f32 %v1458, %v1460
    %v1462 = vadd.f32 %v1458, %v1461
    %vm1463 = vweird.f32 %v1448
    %vm1464 = vweird.f32 %v1458
    %vm1465 = vmor %vm1463, %vm1464
    %v1466 = vsel %vm1465, %v1458, %v1462
    %v1467 = vand.u32 2147483647, %v1448
    %vm1468 = vcmp.eq.f32.partialorder %v1467, 8.507059e+37
    %v1469 = vand.u32 %v1448, 2147483648
    %v1470 = vor.u32 1.1754944e-38, %v1469
    %v1471 = vsel %vm1468, %v1470, %v1466
    %v1472 = vrcp.pop %v1451
    %v1473 = vmul.f32 %v1451, %v1472
    %v1474 = vsub.f32 1.0, %v1473
    %v1475 = vmul.f32 %v1472, %v1474
    %v1476 = vadd.f32 %v1472, %v1475
    %vm1477 = vweird.f32 %v1451
    %vm1478 = vweird.f32 %v1472
    %vm1479 = vmor %vm1477, %vm1478
    %v1480 = vsel %vm1479, %v1472, %v1476
    %v1481 = vand.u32 2147483647, %v1451
    %vm1482 = vcmp.eq.f32.partialorder %v1481, 8.507059e+37
    %v1483 = vand.u32 %v1451, 2147483648
    %v1484 = vor.u32 1.1754944e-38, %v1483
    %v1485 = vsel %vm1482, %v1484, %v1480
    %v1486 = vrcp.pop %v1454
    %v1487 = vmul.f32 %v1454, %v1486
    %v1488 = vsub.f32 1.0, %v1487
    %v1489 = vmul.f32 %v1486, %v1488
    %v1490 = vadd.f32 %v1486, %v1489
    %vm1491 = vweird.f32 %v1454
    %vm1492 = vweird.f32 %v1486
    %vm1493 = vmor %vm1491, %vm1492
    %v1494 = vsel %vm1493, %v1486, %v1490
    %v1495 = vand.u32 2147483647, %v1454
    %vm1496 = vcmp.eq.f32.partialorder %v1495, 8.507059e+37
    %v1497 = vand.u32 %v1454, 2147483648
    %v1498 = vor.u32 1.1754944e-38, %v1497
    %v1499 = vsel %vm1496, %v1498, %v1494
    %v1500 = vrcp.pop %v1457
    %v1501 = vmul.f32 %v1457, %v1500
    %v1502 = vsub.f32 1.0, %v1501
    %v1503 = vmul.f32 %v1500, %v1502
    %v1504 = vadd.f32 %v1500, %v1503
    %vm1505 = vweird.f32 %v1457
    %vm1506 = vweird.f32 %v1500
    %vm1507 = vmor %vm1505, %vm1506
    %v1508 = vsel %vm1507, %v1500, %v1504
    %v1509 = vand.u32 2147483647, %v1457
    %vm1510 = vcmp.eq.f32.partialorder %v1509, 8.507059e+37
    %v1511 = vand.u32 %v1457, 2147483648
    %v1512 = vor.u32 1.1754944e-38, %v1511
    %v1513 = vsel %vm1510, %v1512, %v1508
    %v1514 = vmul.f32 %v1439, %v1471
    %v1515 = vmul.f32 %v1441, %v1485
    %v1516 = vmul.f32 %v1443, %v1499
    %v1517 = vmul.f32 %v1445, %v1513
    %1518 = vrot.lane.b32.xlu0 %v256, 48
    %v1519 = vpop.permute.xlu0 %1518
    %1520 = vrot.lane.b32.xlu0 %v257, 48
    %v1521 = vpop.permute.xlu0 %1520
    %v1525 = vsel %vm866, %v1514, 0
    %v1528 = vsel %vm866, %v1515, 0
    %v1531 = vsel %vm866, %v1516, 0
    %v1534 = vsel %vm866, %v1517, 0
    %1536 = vmatpush.msra.mxu0 0.0
    %1537 = vmatpush.msra.mxu0 0.0
    %1538 = vmatpush.msra.mxu0 0.0
    %1539 = vmatpush.msra.mxu0 0.0
    %1540 = vmatpush.msra.mxu0 0.0
    %1541 = vmatpush.msra.mxu0 0.0
    %1542 = vmatpush.msra.mxu0 0.0
    %1543 = vmatpush.msra.mxu0 0.0
    %1544 = vmatpush.msra.mxu0 0.0
    %1545 = vmatpush.msra.mxu0 0.0
    %1546 = vmatpush.msra.mxu0 0.0
    %1547 = vmatpush.msra.mxu0 0.0
    %1548 = vmatpush.msra.mxu0 0.0
    %1549 = vmatpush.msra.mxu0 0.0
    %1550 = vmatpush.msra.mxu0 %v1521
    %1551 = vmatpush.msra.mxu0 %v1519
    %1552 = vmatmul.f32.gmra.mxu0 %v1525
    %v1553 = vpop.f32.mrf.mxu0
    %v1554 = vadd.f32 0.0, %v1553
    %1555 = vmatmul.f32.gmra.mxu0 %v1528
    %v1556 = vpop.f32.mrf.mxu0
    %v1557 = vadd.f32 0.0, %v1556
    %1558 = vmatmul.f32.gmra.mxu0 %v1531
    %v1559 = vpop.f32.mrf.mxu0
    %v1560 = vadd.f32 0.0, %v1559
    %1561 = vmatmul.f32.gmra.mxu0 %v1534
    %v1562 = vpop.f32.mrf.mxu0
    %v1563 = vadd.f32 0.0, %v1562
    %1564 = vdwg.mxu0
    %1565 = vrot.lane.b32.xlu0 %v280, 40
    %v1566 = vpop.permute.xlu0 %1565
    %1567 = vrot.lane.b32.xlu0 %v281, 40
    %v1568 = vpop.permute.xlu0 %1567
    %1569 = vrot.lane.b32.xlu0 %v282, 40
    %v1570 = vpop.permute.xlu0 %1569
    %1571 = vrot.lane.b32.xlu0 %v283, 40
    %v1572 = vpop.permute.xlu0 %1571
    %1573 = vrot.lane.b32.xlu0 %v248, 72
    %v1574 = vpop.permute.xlu0 %1573
    %1575 = vrot.lane.b32.xlu0 %v249, 72
    %v1576 = vpop.permute.xlu0 %1575
    %v1577 = vsel %vm297, %v1566, 0
    %v1579 = vsel %vm297, %v1568, 0
    %v1581 = vsel %vm297, %v1570, 0
    %v1583 = vsel %vm297, %v1572, 0
    %v1585 = vsel %vm297, %v1574, 0
    %v1587 = vsel %vm297, %v1576, 0
    %1589 = vmatpush.xpose.msra.mxu0 0.0
    %1590 = vmatpush.xpose.msra.mxu0 0.0
    %1591 = vmatpush.xpose.msra.mxu0 0.0
    %1592 = vmatpush.xpose.msra.mxu0 0.0
    %1593 = vmatpush.xpose.msra.mxu0 0.0
    %1594 = vmatpush.xpose.msra.mxu0 0.0
    %1595 = vmatpush.xpose.msra.mxu0 0.0
    %1596 = vmatpush.xpose.msra.mxu0 0.0
    %1597 = vmatpush.xpose.msra.mxu0 0.0
    %1598 = vmatpush.xpose.msra.mxu0 0.0
    %1599 = vmatpush.xpose.msra.mxu0 0.0
    %1600 = vmatpush.xpose.msra.mxu0 0.0
    %1601 = vmatpush.xpose.msra.mxu0 0.0
    %1602 = vmatpush.xpose.msra.mxu0 0.0
    %1603 = vmatpush.xpose.msra.mxu0 %v1587
    %1604 = vmatpush.xpose.msra.mxu0 %v1585
    %1605 = vmatmul.f32.gmra.mxu0 %v1577
    %v1606 = vpop.f32.mrf.mxu0
    %v1607 = vadd.f32 %v287, %v1606
    %1608 = vmatmul.f32.gmra.mxu0 %v1579
    %v1609 = vpop.f32.mrf.mxu0
    %v1610 = vadd.f32 %v288, %v1609
    %1611 = vmatmul.f32.gmra.mxu0 %v1581
    %v1612 = vpop.f32.mrf.mxu0
    %v1613 = vadd.f32 %v289, %v1612
    %1614 = vmatmul.f32.gmra.mxu0 %v1583
    %v1615 = vpop.f32.mrf.mxu0
    %v1616 = vadd.f32 %v290, %v1615
    %1617 = vdwg.mxu0
    %v1618 = vsel %vm866, %v1607, -inf
    %1619 = vmax.xlane.f32.xlu0 %v1618
    %v1620 = vpop.xlane.xlu0 %1619
    %v1621 = vsel %vm866, %v1610, -inf
    %1622 = vmax.xlane.f32.xlu0 %v1621
    %v1623 = vpop.xlane.xlu0 %1622
    %v1624 = vsel %vm866, %v1613, -inf
    %1625 = vmax.xlane.f32.xlu0 %v1624
    %v1626 = vpop.xlane.xlu0 %1625
    %v1627 = vsel %vm866, %v1616, -inf
    %1628 = vmax.xlane.f32.xlu0 %v1627
    %v1629 = vpop.xlane.xlu0 %1628
    %v1630 = vsub.f32 %v1607, %v1620
    %v1631 = vsub.f32 %v1610, %v1623
    %v1632 = vsub.f32 %v1613, %v1626
    %v1633 = vsub.f32 %v1616, %v1629
    %v1634 = vmul.f32 %v1630, 1.442695
    %v1635 = vpow.pop %v1634
    %v1636 = vmul.f32 %v1631, 1.442695
    %v1637 = vpow.pop %v1636
    %v1638 = vmul.f32 %v1632, 1.442695
    %v1639 = vpow.pop %v1638
    %v1640 = vmul.f32 %v1633, 1.442695
    %v1641 = vpow.pop %v1640
    %v1642 = vsel %vm866, %v1635, 0.0
    %1643 = vadd.xlane.f32.xlu0 %v1642
    %v1644 = vpop.xlane.xlu0 %1643
    %v1645 = vsel %vm866, %v1637, 0.0
    %1646 = vadd.xlane.f32.xlu0 %v1645
    %v1647 = vpop.xlane.xlu0 %1646
    %v1648 = vsel %vm866, %v1639, 0.0
    %1649 = vadd.xlane.f32.xlu0 %v1648
    %v1650 = vpop.xlane.xlu0 %1649
    %v1651 = vsel %vm866, %v1641, 0.0
    %1652 = vadd.xlane.f32.xlu0 %v1651
    %v1653 = vpop.xlane.xlu0 %1652
    %v1654 = vrcp.pop %v1644
    %v1655 = vmul.f32 %v1644, %v1654
    %v1656 = vsub.f32 1.0, %v1655
    %v1657 = vmul.f32 %v1654, %v1656
    %v1658 = vadd.f32 %v1654, %v1657
    %vm1659 = vweird.f32 %v1644
    %vm1660 = vweird.f32 %v1654
    %vm1661 = vmor %vm1659, %vm1660
    %v1662 = vsel %vm1661, %v1654, %v1658
    %v1663 = vand.u32 2147483647, %v1644
    %vm1664 = vcmp.eq.f32.partialorder %v1663, 8.507059e+37
    %v1665 = vand.u32 %v1644, 2147483648
    %v1666 = vor.u32 1.1754944e-38, %v1665
    %v1667 = vsel %vm1664, %v1666, %v1662
    %v1668 = vrcp.pop %v1647
    %v1669 = vmul.f32 %v1647, %v1668
    %v1670 = vsub.f32 1.0, %v1669
    %v1671 = vmul.f32 %v1668, %v1670
    %v1672 = vadd.f32 %v1668, %v1671
    %vm1673 = vweird.f32 %v1647
    %vm1674 = vweird.f32 %v1668
    %vm1675 = vmor %vm1673, %vm1674
    %v1676 = vsel %vm1675, %v1668, %v1672
    %v1677 = vand.u32 2147483647, %v1647
    %vm1678 = vcmp.eq.f32.partialorder %v1677, 8.507059e+37
    %v1679 = vand.u32 %v1647, 2147483648
    %v1680 = vor.u32 1.1754944e-38, %v1679
    %v1681 = vsel %vm1678, %v1680, %v1676
    %v1682 = vrcp.pop %v1650
    %v1683 = vmul.f32 %v1650, %v1682
    %v1684 = vsub.f32 1.0, %v1683
    %v1685 = vmul.f32 %v1682, %v1684
    %v1686 = vadd.f32 %v1682, %v1685
    %vm1687 = vweird.f32 %v1650
    %vm1688 = vweird.f32 %v1682
    %vm1689 = vmor %vm1687, %vm1688
    %v1690 = vsel %vm1689, %v1682, %v1686
    %v1691 = vand.u32 2147483647, %v1650
    %vm1692 = vcmp.eq.f32.partialorder %v1691, 8.507059e+37
    %v1693 = vand.u32 %v1650, 2147483648
    %v1694 = vor.u32 1.1754944e-38, %v1693
    %v1695 = vsel %vm1692, %v1694, %v1690
    %v1696 = vrcp.pop %v1653
    %v1697 = vmul.f32 %v1653, %v1696
    %v1698 = vsub.f32 1.0, %v1697
    %v1699 = vmul.f32 %v1696, %v1698
    %v1700 = vadd.f32 %v1696, %v1699
    %vm1701 = vweird.f32 %v1653
    %vm1702 = vweird.f32 %v1696
    %vm1703 = vmor %vm1701, %vm1702
    %v1704 = vsel %vm1703, %v1696, %v1700
    %v1705 = vand.u32 2147483647, %v1653
    %vm1706 = vcmp.eq.f32.partialorder %v1705, 8.507059e+37
    %v1707 = vand.u32 %v1653, 2147483648
    %v1708 = vor.u32 1.1754944e-38, %v1707
    %v1709 = vsel %vm1706, %v1708, %v1704
    %v1710 = vmul.f32 %v1635, %v1667
    %v1711 = vmul.f32 %v1637, %v1681
    %v1712 = vmul.f32 %v1639, %v1695
    %v1713 = vmul.f32 %v1641, %v1709
    %1714 = vrot.lane.b32.xlu0 %v256, 40
    %v1715 = vpop.permute.xlu0 %1714
    %1716 = vrot.lane.b32.xlu0 %v257, 40
    %v1717 = vpop.permute.xlu0 %1716
    %v1721 = vsel %vm866, %v1710, 0
    %v1724 = vsel %vm866, %v1711, 0
    %v1727 = vsel %vm866, %v1712, 0
    %v1730 = vsel %vm866, %v1713, 0
    %1732 = vmatpush.msra.mxu0 0.0
    %1733 = vmatpush.msra.mxu0 0.0
    %1734 = vmatpush.msra.mxu0 0.0
    %1735 = vmatpush.msra.mxu0 0.0
    %1736 = vmatpush.msra.mxu0 0.0
    %1737 = vmatpush.msra.mxu0 0.0
    %1738 = vmatpush.msra.mxu0 0.0
    %1739 = vmatpush.msra.mxu0 0.0
    %1740 = vmatpush.msra.mxu0 0.0
    %1741 = vmatpush.msra.mxu0 0.0
    %1742 = vmatpush.msra.mxu0 0.0
    %1743 = vmatpush.msra.mxu0 0.0
    %1744 = vmatpush.msra.mxu0 0.0
    %1745 = vmatpush.msra.mxu0 0.0
    %1746 = vmatpush.msra.mxu0 %v1717
    %1747 = vmatpush.msra.mxu0 %v1715
    %1748 = vmatmul.f32.gmra.mxu0 %v1721
    %v1749 = vpop.f32.mrf.mxu0
    %v1750 = vadd.f32 0.0, %v1749
    %1751 = vmatmul.f32.gmra.mxu0 %v1724
    %v1752 = vpop.f32.mrf.mxu0
    %v1753 = vadd.f32 0.0, %v1752
    %1754 = vmatmul.f32.gmra.mxu0 %v1727
    %v1755 = vpop.f32.mrf.mxu0
    %v1756 = vadd.f32 0.0, %v1755
    %1757 = vmatmul.f32.gmra.mxu0 %v1730
    %v1758 = vpop.f32.mrf.mxu0
    %v1759 = vadd.f32 0.0, %v1758
    %1760 = vdwg.mxu0
    %1765 = vrot.lane.b32.xlu0 %v1358, 8
    %v1766 = vpop.permute.xlu0 %1765
    %1767 = vrot.lane.b32.xlu0 %v1361, 8
    %v1768 = vpop.permute.xlu0 %1767
    %1769 = vrot.lane.b32.xlu0 %v1364, 8
    %v1770 = vpop.permute.xlu0 %1769
    %1771 = vrot.lane.b32.xlu0 %v1367, 8
    %v1772 = vpop.permute.xlu0 %1771
    %1781 = vrot.lane.b32.xlu0 %v1554, 16
    %v1782 = vpop.permute.xlu0 %1781
    %1783 = vrot.lane.b32.xlu0 %v1557, 16
    %v1784 = vpop.permute.xlu0 %1783
    %1785 = vrot.lane.b32.xlu0 %v1560, 16
    %v1786 = vpop.permute.xlu0 %1785
    %1787 = vrot.lane.b32.xlu0 %v1563, 16
    %v1788 = vpop.permute.xlu0 %1787
    %1797 = vrot.lane.b32.xlu0 %v1750, 24
    %v1798 = vpop.permute.xlu0 %1797
    %1799 = vrot.lane.b32.xlu0 %v1753, 24
    %v1800 = vpop.permute.xlu0 %1799
    %1801 = vrot.lane.b32.xlu0 %v1756, 24
    %v1802 = vpop.permute.xlu0 %1801
    %1803 = vrot.lane.b32.xlu0 %v1759, 24
    %v1804 = vpop.permute.xlu0 %1803
    %v1809 = vsel %vm297, %v1162, %v1766
    %v1810 = vsel %vm297, %v1165, %v1768
    %v1811 = vsel %vm297, %v1168, %v1770
    %v1812 = vsel %vm297, %v1171, %v1772
    %v1813 = vsel %vm866, %v1809, %v1782
    %v1814 = vsel %vm866, %v1810, %v1784
    %v1815 = vsel %vm866, %v1811, %v1786
    %v1816 = vsel %vm866, %v1812, %v1788
    %v1817 = vsel %vm869, %v1813, %v1798
    %v1818 = vsel %vm869, %v1814, %v1800
    %v1819 = vsel %vm869, %v1815, %v1802
    %v1820 = vsel %vm869, %v1816, %v1804
    %v1821 = vperm.slane %v968, 0
    %v1823 = vsel %vm162, %v1817, 0
    %v1826 = vsel %vm162, %v1818, 0
    %v1829 = vsel %vm162, %v1819, 0
    %v1832 = vsel %vm162, %v1820, 0
    %1834 = vmatpush.msra.mxu0 0.0
    %1835 = vmatpush.msra.mxu0 0.0
    %1836 = vmatpush.msra.mxu0 0.0
    %1837 = vmatpush.msra.mxu0 0.0
    %1838 = vmatpush.msra.mxu0 0.0
    %1839 = vmatpush.msra.mxu0 0.0
    %1840 = vmatpush.msra.mxu0 0.0
    %1841 = vmatpush.msra.mxu0 0.0
    %1842 = vmatpush.msra.mxu0 0.0
    %1843 = vmatpush.msra.mxu0 0.0
    %1844 = vmatpush.msra.mxu0 0.0
    %1845 = vmatpush.msra.mxu0 0.0
    %1846 = vmatpush.msra.mxu0 %v967
    %1847 = vmatpush.msra.mxu0 %v966
    %1848 = vmatpush.msra.mxu0 %v965
    %1849 = vmatpush.msra.mxu0 %v964
    %1850 = vmatmul.f32.gmra.mxu0 %v1823
    %v1851 = vpop.f32.mrf.mxu0
    %v1852 = vadd.f32 %v1821, %v1851
    %1853 = vmatmul.f32.gmra.mxu0 %v1826
    %v1854 = vpop.f32.mrf.mxu0
    %v1855 = vadd.f32 %v1821, %v1854
    %1856 = vmatmul.f32.gmra.mxu0 %v1829
    %v1857 = vpop.f32.mrf.mxu0
    %v1858 = vadd.f32 %v1821, %v1857
    %1859 = vmatmul.f32.gmra.mxu0 %v1832
    %v1860 = vpop.f32.mrf.mxu0
    %v1861 = vadd.f32 %v1821, %v1860
    %1862 = vdwg.mxu0
    %v1863 = vadd.f32 %v147, %v1852
    %v1864 = vadd.f32 %v150, %v1855
    %v1865 = vadd.f32 %v153, %v1858
    %v1866 = vadd.f32 %v156, %v1861
    %v1867 = vld [vmem:[#allocation2 + $0xc] sm:$0x1]
    %v1868 = vld [vmem:[#allocation2 + $0xd] sm:$0x1]
    %v1869 = vsel %vm162, %v1863, 0.0
    %1870 = vadd.xlane.f32.xlu0 %v1869
    %v1871 = vpop.xlane.xlu0 %1870
    %v1872 = vsel %vm162, %v1864, 0.0
    %1873 = vadd.xlane.f32.xlu0 %v1872
    %v1874 = vpop.xlane.xlu0 %1873
    %v1875 = vsel %vm162, %v1865, 0.0
    %1876 = vadd.xlane.f32.xlu0 %v1875
    %v1877 = vpop.xlane.xlu0 %1876
    %v1878 = vsel %vm162, %v1866, 0.0
    %1879 = vadd.xlane.f32.xlu0 %v1878
    %v1880 = vpop.xlane.xlu0 %1879
    %v1881 = vmul.f32 %v1871, %v918
    %v1882 = vmul.f32 %v1874, %v918
    %v1883 = vmul.f32 %v1877, %v918
    %v1884 = vmul.f32 %v1880, %v918
    %v1885 = vsub.f32 %v1863, %v1881
    %v1886 = vsub.f32 %v1864, %v1882
    %v1887 = vsub.f32 %v1865, %v1883
    %v1888 = vsub.f32 %v1866, %v1884
    %v1889 = vmul.f32 %v1885, %v1885
    %v1890 = vmul.f32 %v1886, %v1886
    %v1891 = vmul.f32 %v1887, %v1887
    %v1892 = vmul.f32 %v1888, %v1888
    %v1893 = vsel %vm162, %v1889, 0.0
    %1894 = vadd.xlane.f32.xlu0 %v1893
    %v1895 = vpop.xlane.xlu0 %1894
    %v1896 = vsel %vm162, %v1890, 0.0
    %1897 = vadd.xlane.f32.xlu0 %v1896
    %v1898 = vpop.xlane.xlu0 %1897
    %v1899 = vsel %vm162, %v1891, 0.0
    %1900 = vadd.xlane.f32.xlu0 %v1899
    %v1901 = vpop.xlane.xlu0 %1900
    %v1902 = vsel %vm162, %v1892, 0.0
    %1903 = vadd.xlane.f32.xlu0 %v1902
    %v1904 = vpop.xlane.xlu0 %1903
    %v1905 = vmul.f32 %v1895, %v918
    %v1906 = vmul.f32 %v1898, %v918
    %v1907 = vmul.f32 %v1901, %v918
    %v1908 = vmul.f32 %v1904, %v918
    %v1909 = vadd.f32 %v1905, 1e-05
    %v1910 = vadd.f32 %v1906, 1e-05
    %v1911 = vadd.f32 %v1907, 1e-05
    %v1912 = vadd.f32 %v1908, 1e-05
    %v1913 = vrsqrt.pop %v1909
    %v1914 = vmul.f32 %v1913, %v1909
    %v1915 = vmul.f32 %v1914, %v1913
    %v1916 = vmul.f32 0.5, %v1915
    %v1917 = vsub.f32 1.5, %v1916
    %v1918 = vmul.f32 %v1913, %v1917
    %vm1919 = vweird.f32 %v1909
    %vm1920 = vweird.f32 %v1913
    %vm1921 = vmor %vm1919, %vm1920
    %v1922 = vsel %vm1921, %v1913, %v1918
    %v1923 = vrsqrt.pop %v1910
    %v1924 = vmul.f32 %v1923, %v1910
    %v1925 = vmul.f32 %v1924, %v1923
    %v1926 = vmul.f32 0.5, %v1925
    %v1927 = vsub.f32 1.5, %v1926
    %v1928 = vmul.f32 %v1923, %v1927
    %vm1929 = vweird.f32 %v1910
    %vm1930 = vweird.f32 %v1923
    %vm1931 = vmor %vm1929, %vm1930
    %v1932 = vsel %vm1931, %v1923, %v1928
    %v1933 = vrsqrt.pop %v1911
    %v1934 = vmul.f32 %v1933, %v1911
    %v1935 = vmul.f32 %v1934, %v1933
    %v1936 = vmul.f32 0.5, %v1935
    %v1937 = vsub.f32 1.5, %v1936
    %v1938 = vmul.f32 %v1933, %v1937
    %vm1939 = vweird.f32 %v1911
    %vm1940 = vweird.f32 %v1933
    %vm1941 = vmor %vm1939, %vm1940
    %v1942 = vsel %vm1941, %v1933, %v1938
    %v1943 = vrsqrt.pop %v1912
    %v1944 = vmul.f32 %v1943, %v1912
    %v1945 = vmul.f32 %v1944, %v1943
    %v1946 = vmul.f32 0.5, %v1945
    %v1947 = vsub.f32 1.5, %v1946
    %v1948 = vmul.f32 %v1943, %v1947
    %vm1949 = vweird.f32 %v1912
    %vm1950 = vweird.f32 %v1943
    %vm1951 = vmor %vm1949, %vm1950
    %v1952 = vsel %vm1951, %v1943, %v1948
    %v1953 = vmul.f32 %v1885, %v1922
    %v1954 = vmul.f32 %v1886, %v1932
    %v1955 = vmul.f32 %v1887, %v1942
    %v1956 = vmul.f32 %v1888, %v1952
    %v1957 = vperm.slane %v1867, 0
    %v1958 = vmul.f32 %v1953, %v1957
    %v1959 = vmul.f32 %v1954, %v1957
    %v1960 = vmul.f32 %v1955, %v1957
    %v1961 = vmul.f32 %v1956, %v1957
    %v1962 = vperm.slane %v1868, 0
    %v1963 = vadd.f32 %v1958, %v1962
    %v1964 = vadd.f32 %v1959, %v1962
    %v1965 = vadd.f32 %v1960, %v1962
    %v1966 = vadd.f32 %v1961, %v1962
    %v1968 = vsel %vm162, %v286, 0
    %1970 = vmatpush.msra.mxu0 0.0
    %1971 = vmatpush.msra.mxu0 0.0
    %1972 = vmatpush.msra.mxu0 0.0
    %1973 = vmatpush.msra.mxu0 0.0
    %1974 = vmatpush.msra.mxu0 0.0
    %1975 = vmatpush.msra.mxu0 0.0
    %1976 = vmatpush.msra.mxu0 0.0
    %1977 = vmatpush.msra.mxu0 0.0
    %1978 = vmatpush.msra.mxu0 0.0
    %1979 = vmatpush.msra.mxu0 0.0
    %1980 = vmatpush.msra.mxu0 0.0
    %1981 = vmatpush.msra.mxu0 0.0
    %1982 = vmatpush.msra.mxu0 %v1966
    %1983 = vmatpush.msra.mxu0 %v1965
    %1984 = vmatpush.msra.mxu0 %v1964
    %1985 = vmatpush.msra.mxu0 %v1963
    %1986 = vmatmul.f32.gmra.mxu0 %v1968
    %v1987 = vpop.f32.mrf.mxu0
    %v1988 = vadd.f32 0.0, %v1987
    %1989 = vdwg.mxu0
    %v1991 = vsel %vm866, %v291, 0
    %1993 = vmatpush.msra.mxu0 0.0
    %1994 = vmatpush.msra.mxu0 0.0
    %1995 = vmatpush.msra.mxu0 0.0
    %1996 = vmatpush.msra.mxu0 0.0
    %1997 = vmatpush.msra.mxu0 0.0
    %1998 = vmatpush.msra.mxu0 0.0
    %1999 = vmatpush.msra.mxu0 0.0
    %2000 = vmatpush.msra.mxu0 0.0
    %2001 = vmatpush.msra.mxu0 0.0
    %2002 = vmatpush.msra.mxu0 0.0
    %2003 = vmatpush.msra.mxu0 0.0
    %2004 = vmatpush.msra.mxu0 0.0
    %2005 = vmatpush.msra.mxu0 0.0
    %2006 = vmatpush.msra.mxu0 0.0
    %2007 = vmatpush.msra.mxu0 %v962
    %2008 = vmatpush.msra.mxu0 %v961
    %2009 = vmatmul.f32.gmra.mxu0 %v1991
    %v2010 = vpop.f32.mrf.mxu0
    %v2011 = vadd.f32 %v1988, %v2010
    %2012 = vdwg.mxu0
    %vm2013 = vcmask 254976
    %2014 = vst.msk [vmem:[#allocation7] sm:$0x3] %vm2013, %v2011
    // Predicated region
    $region46: #{tpu_custom_call.1} parent=1 // pred_check
      _
    $region47: #{tpu_custom_call.1} parent=1 // pred_check_branch
      %2016 = sbr.rel (0) target = $region49
    $region48: #{tpu_custom_call.1} parent=1 // pred_region
      %2018 = vsyncadd [#allocation4], 0
      %s2020 = sshll.u32 [#allocation7], 4
      %s2021 = int_to_ptr.vmem [resolvable:$true] %s2020
      %s2022 = sshll.u32 %s9, 4
      %s2023 = int_to_ptr.hbm [resolvable:$true] %s2022
      %2025 = dma.vmem_to_hbm [thread:$0]  %s2021, 32, %s2023, [#allocation4]
    $region49: #{tpu_custom_call.1} parent=1 // pred_fallthru
      _
    // Predicated region
    $region50: #{tpu_custom_call.1} parent=1 // pred_check
      _
    $region51: #{tpu_custom_call.1} parent=1 // pred_check_branch
      %2027 = sbr.rel (0) target = $region53
    $region52: #{tpu_custom_call.1} parent=1 // pred_region
      %2029 = dma.done [#allocation4], 32
    $region53: #{tpu_custom_call.1} parent=1 // pred_fallthru
      _
    %2030 = vsyncpa [#allocation3], 1
    %2031 = vsyncpa [#allocation6], 1
    %2032 = vsyncpa [#allocation4], 1

</llo_original>
